<compile_context>
chip_gen: v6e
topology: v6e:2x2x1
jax: 0.10.0
libtpu: 0.0.40
codegen_flags: <defaults>
</compile_context>

<pallas_src>
import functools
import math

import jax
import jax.numpy as jnp
from jax.experimental import pallas as pl
from jax.experimental.pallas import tpu as pltpu

_MXU_DTYPE = jnp.bfloat16
# Above the default scoped VMEM on all generations, below physical on v7x (64 MiB).
_VMEM_LIMIT_BYTES = 48 * 1024 * 1024


def _layernorm(x, w, b):
    # f32 statistics, eps=1e-5 (matches F.layer_norm).
    mu = jnp.mean(x, axis=-1, keepdims=True)
    var = jnp.mean((x - mu) ** 2, axis=-1, keepdims=True)
    return (x - mu) * jax.lax.rsqrt(var + 1e-5) * w + b


def _kv_proj_kernel(k_ref, v_ref, lnw_ref, lnb_ref, wk_ref, bk_ref, wv_ref, bv_ref,
                    kp_ref, vp_ref, *, n_head):
    """LayerNorm + K/V projections for one (batch, kv-tile), head-major bf16 output."""
    k_ln = _layernorm(k_ref[0].astype(jnp.float32), lnw_ref[...], lnb_ref[...])
    v_ln = _layernorm(v_ref[0].astype(jnp.float32), lnw_ref[...], lnb_ref[...])
    k_ln = k_ln.astype(wk_ref.dtype)
    v_ln = v_ln.astype(wv_ref.dtype)
    for h in range(n_head):
        kp_ref[0, h] = (
            jnp.dot(k_ln, wk_ref[h], preferred_element_type=jnp.float32) + bk_ref[h]
        ).astype(kp_ref.dtype)
        vp_ref[0, h] = (
            jnp.dot(v_ln, wv_ref[h], preferred_element_type=jnp.float32) + bv_ref[h]
        ).astype(vp_ref.dtype)


def _attn_kernel(
    q_ref, lnw_ref, lnb_ref, wq_ref, bq_ref, kp_ref, vp_ref, wo_ref, bo_ref,
    o_ref,
    q_ln_s, qp_s, m_s, l_s, acc_s,
    *, n_head, head_dim,
):
    ki = pl.program_id(2)

    @pl.when(ki == 0)
    def _():
        # Query LayerNorm + per-head projection: once per (batch, q-tile).
        q_ln = _layernorm(q_ref[0].astype(jnp.float32), lnw_ref[...], lnb_ref[...])
        q_ln_s[...] = q_ln                       # residual (normalized query), f32
        q_ln_mxu = q_ln.astype(wq_ref.dtype)
        for h in range(n_head):
            qp_s[h] = (
                jnp.dot(q_ln_mxu, wq_ref[h], preferred_element_type=jnp.float32)
                + bq_ref[h]
            ).astype(qp_s.dtype)
        m_s[...] = jnp.full(m_s.shape, -jnp.inf, dtype=m_s.dtype)
        l_s[...] = jnp.zeros(l_s.shape, dtype=l_s.dtype)
        acc_s[...] = jnp.zeros(acc_s.shape, dtype=acc_s.dtype)

    # Online-softmax update for this K/V tile (head-batched, bf16 MXU ops, f32 acc).
    k = kp_ref[0]                                # (H, tk, hd) bf16
    v = vp_ref[0]                                # (H, tk, hd) bf16
    s = jnp.einsum("hqd,hkd->hqk", qp_s[...], k,
                   preferred_element_type=jnp.float32) * (1.0 / math.sqrt(head_dim))
    m_new = jnp.maximum(m_s[...], jnp.max(s, axis=-1, keepdims=True))
    alpha = jnp.exp(m_s[...] - m_new)
    p = jnp.exp(s - m_new)
    l_s[...] = alpha * l_s[...] + jnp.sum(p, axis=-1, keepdims=True)
    acc_s[...] = alpha * acc_s[...] + jnp.einsum(
        "hqk,hkd->hqd", p.astype(v.dtype), v, preferred_element_type=jnp.float32)
    m_s[...] = m_new

    @pl.when(ki == pl.num_programs(2) - 1)
    def _():
        # Normalize, apply fused (out_proj ∘ proj) weight, add fused bias + residual.
        ctx = (acc_s[...] * pl.reciprocal(l_s[...], approx=True)).astype(wo_ref.dtype)
        out = q_ln_s[...] + bo_ref[...]          # residual + fused bias, f32 (tq, D)
        for h in range(n_head):
            out = out + jnp.dot(ctx[h], wo_ref[h], preferred_element_type=jnp.float32)
        # Dropout == identity (eval mode).
        o_ref[0] = out.astype(o_ref.dtype)


def cross_attention_layer(query, key, value, params, n_head, *, block_q=None, block_k=None):
    """query: (B, Lq, D); key/value: (B, Lk, D). Returns (B, Lq, D)."""
    B, Lq, D = query.shape
    Bk, Lk, Dk = key.shape
    assert Bk == B and value.shape == key.shape
    assert Dk == D, "nn.MultiheadAttention default kdim==embed_dim requires key_dim==query_dim"
    assert D % n_head == 0
    hd = D // n_head

    if block_q is None:
        block_q = min(Lq, 256)
    if block_k is None:
        block_k = min(Lk, 512)
    if Lq % block_q:
        block_q = Lq   # TODO(synk): pad + mask ragged q tiles instead of falling back.
    if Lk % block_k:
        block_k = Lk   # TODO(synk): pad + mask ragged kv tiles instead of falling back.
    nq, nk = Lq // block_q, Lk // block_k

    f32 = jnp.float32

    def row(x):                       # 1-D param -> (1, D) f32
        return x.reshape(1, -1).astype(f32)

    def head_w(w):                    # torch Linear weight (Dout, Din) -> (H, Din, hd)
        return jnp.transpose(w.T.reshape(D, n_head, hd), (1, 0, 2)).astype(_MXU_DTYPE)

    def head_b(b):                    # (D,) -> (H, 1, hd) f32
        return b.reshape(n_head, 1, hd).astype(f32)

    wq, wk, wv = jnp.split(params["in_proj_weight"].astype(f32), 3, axis=0)
    bq, bk, bv = jnp.split(params["in_proj_bias"].astype(f32), 3, axis=0)

    # Fuse MHA out_proj with the trailing self.proj Linear (one matmul in-kernel):
    #   (ctx @ Wo^T + bo) @ Wp^T + bp == ctx @ (Wo^T Wp^T) + (bo @ Wp^T + bp)
    wo_f32 = params["out_proj_w"].astype(f32)
    wp_f32 = params["proj_w"].astype(f32)
    w_out = wo_f32.T @ wp_f32.T                                         # (D, D), x @ W form
    b_out = params["out_proj_b"].astype(f32) @ wp_f32.T + params["proj_b"].astype(f32)
    w_out_heads = w_out.reshape(n_head, hd, D).astype(_MXU_DTYPE)       # per-head row blocks

    ln_q_w, ln_q_b = row(params["ln_q_w"]), row(params["ln_q_b"])
    ln_kv_w, ln_kv_b = row(params["ln_kv_w"]), row(params["ln_kv_b"])

    # ---- Kernel 1: K/V LayerNorm + projection, hoisted out of the q-tile loop. ----
    kv_c2 = lambda b, k_: (0, 0)
    kv_c3 = lambda b, k_: (0, 0, 0)
    kp, vp = pl.pallas_call(
        functools.partial(_kv_proj_kernel, n_head=n_head),
        out_shape=(
            jax.ShapeDtypeStruct((B, n_head, Lk, hd), _MXU_DTYPE),
            jax.ShapeDtypeStruct((B, n_head, Lk, hd), _MXU_DTYPE),
        ),
        grid=(B, nk),
        in_specs=[
            pl.BlockSpec((1, block_k, D), lambda b, k_: (b, k_, 0)),
            pl.BlockSpec((1, block_k, D), lambda b, k_: (b, k_, 0)),
            pl.BlockSpec((1, D), kv_c2),
            pl.BlockSpec((1, D), kv_c2),
            pl.BlockSpec((n_head, D, hd), kv_c3),
            pl.BlockSpec((n_head, 1, hd), kv_c3),
            pl.BlockSpec((n_head, D, hd), kv_c3),
            pl.BlockSpec((n_head, 1, hd), kv_c3),
        ],
        out_specs=(
            pl.BlockSpec((1, n_head, block_k, hd), lambda b, k_: (b, 0, k_, 0)),
            pl.BlockSpec((1, n_head, block_k, hd), lambda b, k_: (b, 0, k_, 0)),
        ),
        compiler_params=pltpu.CompilerParams(
            dimension_semantics=("parallel", "parallel"),
            vmem_limit_bytes=_VMEM_LIMIT_BYTES),
    )(key, value, ln_kv_w, ln_kv_b, head_w(wk), head_b(bk), head_w(wv), head_b(bv))

    # ---- Kernel 2: flash-style cross attention + fused output projection + residual. ----
    # TODO(synk): single-buffer the constant weight operands (pipeline_mode=pl.Buffered(1))
    # to halve their VMEM footprint at large D once that knob is verified on this jax build.
    a_c2 = lambda b, qi, ki: (0, 0)
    a_c3 = lambda b, qi, ki: (0, 0, 0)
    out = pl.pallas_call(
        functools.partial(_attn_kernel, n_head=n_head, head_dim=hd),
        out_shape=jax.ShapeDtypeStruct((B, Lq, D), query.dtype),
        grid=(B, nq, nk),
        in_specs=[
            pl.BlockSpec((1, block_q, D), lambda b, qi, ki: (b, qi, 0)),   # query
            pl.BlockSpec((1, D), a_c2),                                    # ln_q weight
            pl.BlockSpec((1, D), a_c2),                                    # ln_q bias
            pl.BlockSpec((n_head, D, hd), a_c3),                           # Wq (per head)
            pl.BlockSpec((n_head, 1, hd), a_c3),                           # bq (per head)
            pl.BlockSpec((1, n_head, block_k, hd), lambda b, qi, ki: (b, 0, ki, 0)),  # Kp
            pl.BlockSpec((1, n_head, block_k, hd), lambda b, qi, ki: (b, 0, ki, 0)),  # Vp
            pl.BlockSpec((n_head, hd, D), a_c3),                           # fused W (per head)
            pl.BlockSpec((1, D), a_c2),                                    # fused bias
        ],
        out_specs=pl.BlockSpec((1, block_q, D), lambda b, qi, ki: (b, qi, 0)),
        scratch_shapes=[
            pltpu.VMEM((block_q, D), jnp.float32),           # normalized q (residual)
            pltpu.VMEM((n_head, block_q, hd), _MXU_DTYPE),   # projected q, head-major
            pltpu.VMEM((n_head, block_q, 1), jnp.float32),   # running max
            pltpu.VMEM((n_head, block_q, 1), jnp.float32),   # running sum
            pltpu.VMEM((n_head, block_q, hd), jnp.float32),  # output accumulator
        ],
        compiler_params=pltpu.CompilerParams(
            dimension_semantics=("parallel", "parallel", "arbitrary"),
            vmem_limit_bytes=_VMEM_LIMIT_BYTES),
    )(query, ln_q_w, ln_q_b, head_w(wq), head_b(bq), kp, vp, w_out_heads, row(b_out))
    return out


def _reference(query, key, value, params, n_head):
    """Pure-JAX f32 reference mirroring PyTorch CrossAttentionLayer.forward (eval mode)."""
    D = query.shape[-1]
    hd = D // n_head

    def ln(x, w, b):
        mu = jnp.mean(x, axis=-1, keepdims=True)
        var = jnp.mean((x - mu) ** 2, axis=-1, keepdims=True)
        return (x - mu) / jnp.sqrt(var + 1e-5) * w + b

    q = ln(query, params["ln_q_w"], params["ln_q_b"])
    k = ln(key, params["ln_kv_w"], params["ln_kv_b"])
    v = ln(value, params["ln_kv_w"], params["ln_kv_b"])

    wq, wk, wv = jnp.split(params["in_proj_weight"], 3, axis=0)
    bq, bk, bv = jnp.split(params["in_proj_bias"], 3, axis=0)
    qp = q @ wq.T + bq
    kp = k @ wk.T + bk
    vp = v @ wv.T + bv

    B, Lq, _ = qp.shape
    Lk = kp.shape[1]
    qh = qp.reshape(B, Lq, n_head, hd).transpose(0, 2, 1, 3)
    kh = kp.reshape(B, Lk, n_head, hd).transpose(0, 2, 1, 3)
    vh = vp.reshape(B, Lk, n_head, hd).transpose(0, 2, 1, 3)
    s = jnp.einsum("bhqd,bhkd->bhqk", qh, kh) / math.sqrt(hd)
    p = jax.nn.softmax(s, axis=-1)
    ctx = jnp.einsum("bhqk,bhkd->bhqd", p, vh).transpose(0, 2, 1, 3).reshape(B, Lq, D)

    attn = ctx @ params["out_proj_w"].T + params["out_proj_b"]
    attn = attn @ params["proj_w"].T + params["proj_b"]
    return q + attn


if __name__ == "__main__":
    # Small shapes, chosen so the q-tiling (nq=2) and online-softmax K/V streaming (nk=2)
    # paths are actually exercised.
    B, Lq, Lk, D, n_head = 2, 16, 32, 32, 4

    key0 = jax.random.PRNGKey(0)
    ks = jax.random.split(key0, 12)

    query = jax.random.normal(ks[0], (B, Lq, D), jnp.float32)
    key_in = jax.random.normal(ks[1], (B, Lk, D), jnp.float32)
    value_in = jax.random.normal(ks[2], (B, Lk, D), jnp.float32)

    params = {
        "ln_q_w": 1.0 + 0.1 * jax.random.normal(ks[3], (D,), jnp.float32),
        "ln_q_b": 0.1 * jax.random.normal(ks[4], (D,), jnp.float32),
        "ln_kv_w": 1.0 + 0.1 * jax.random.normal(ks[5], (D,), jnp.float32),
        "ln_kv_b": 0.1 * jax.random.normal(ks[6], (D,), jnp.float32),
        # nn.MultiheadAttention packed in-projection: (3D, D) / (3D,)
        "in_proj_weight": 0.1 * jax.random.normal(ks[7], (3 * D, D), jnp.float32),
        "in_proj_bias": 0.05 * jax.random.normal(ks[8], (3 * D,), jnp.float32),
        # MHA out_proj Linear(D, D)
        "out_proj_w": 0.1 * jax.random.normal(ks[9], (D, D), jnp.float32),
        "out_proj_b": 0.05 * jax.random.normal(ks[10], (D,), jnp.float32),
        # self.proj Linear(D, D)
        "proj_w": 0.1 * jax.random.normal(ks[11], (D, D), jnp.float32),
        "proj_b": jnp.zeros((D,), jnp.float32),
    }

    out = cross_attention_layer(query, key_in, value_in, params, n_head,
                                block_q=8, block_k=16)
    out = jax.block_until_ready(out)

    ref = _reference(query, key_in, value_in, params, n_head)
    assert out.shape == (B, Lq, D)
    # bf16 MXU operands, fused out_proj∘proj weight and approx reciprocal reassociate
    # rounding vs the f32 reference -> moderately loose tolerance.
    err = float(jnp.max(jnp.abs(out - ref)))
    assert jnp.allclose(out, ref, atol=2e-2, rtol=2e-2), err

    print("KERNEL_OK")
</pallas_src>

<mosaic_0001>
module attributes {stable_mosaic.version = 11 : i64} {
  func.func @_kv_proj_kernel(%arg0: i32, %arg1: i32, %arg2: memref<1x16x32xf32, #tpu.memory_space<vmem>>, %arg3: memref<1x16x32xf32, #tpu.memory_space<vmem>>, %arg4: memref<1x32xf32, #tpu.memory_space<vmem>>, %arg5: memref<1x32xf32, #tpu.memory_space<vmem>>, %arg6: memref<4x32x8xbf16, #tpu.memory_space<vmem>>, %arg7: memref<4x1x8xf32, #tpu.memory_space<vmem>>, %arg8: memref<4x32x8xbf16, #tpu.memory_space<vmem>>, %arg9: memref<4x1x8xf32, #tpu.memory_space<vmem>>, %arg10: memref<1x4x16x8xbf16, #tpu.memory_space<vmem>>, %arg11: memref<1x4x16x8xbf16, #tpu.memory_space<vmem>>) attributes {dimension_semantics = [#tpu.dimension_semantics<parallel>, #tpu.dimension_semantics<parallel>], iteration_bounds = array<i64: 2, 2>, scalar_prefetch = 0 : i64, scratch_operands = 0 : i64, tpu.core_type = #tpu.core_type<tc>, window_params = [{transform_indices = @transform_0, window_bounds = array<i64: 1, 16, 32>}, {transform_indices = @transform_1, window_bounds = array<i64: 1, 16, 32>}, {pipeline_mode = #tpu.pipeline_mode<synchronous>, transform_indices = @transform_2, window_bounds = array<i64: 1, 32>}, {pipeline_mode = #tpu.pipeline_mode<synchronous>, transform_indices = @transform_3, window_bounds = array<i64: 1, 32>}, {pipeline_mode = #tpu.pipeline_mode<synchronous>, transform_indices = @transform_4, window_bounds = array<i64: 4, 32, 8>}, {pipeline_mode = #tpu.pipeline_mode<synchronous>, transform_indices = @transform_5, window_bounds = array<i64: 4, 1, 8>}, {pipeline_mode = #tpu.pipeline_mode<synchronous>, transform_indices = @transform_6, window_bounds = array<i64: 4, 32, 8>}, {pipeline_mode = #tpu.pipeline_mode<synchronous>, transform_indices = @transform_7, window_bounds = array<i64: 4, 1, 8>}, {transform_indices = @transform_8, window_bounds = array<i64: 1, 4, 16, 8>}, {transform_indices = @transform_9, window_bounds = array<i64: 1, 4, 16, 8>}]} {
    %c0 = arith.constant 0 : index
    %c0_0 = arith.constant 0 : index
    %c0_1 = arith.constant 0 : index
    %0 = vector.load %arg2[%c0, %c0_0, %c0_1] : memref<1x16x32xf32, #tpu.memory_space<vmem>>, vector<1x16x32xf32>
    %1 = vector.shape_cast %0 : vector<1x16x32xf32> to vector<16x32xf32>
    %c0_2 = arith.constant 0 : index
    %c0_3 = arith.constant 0 : index
    %2 = vector.load %arg4[%c0_2, %c0_3] : memref<1x32xf32, #tpu.memory_space<vmem>>, vector<1x32xf32>
    %c0_4 = arith.constant 0 : index
    %c0_5 = arith.constant 0 : index
    %3 = vector.load %arg5[%c0_4, %c0_5] : memref<1x32xf32, #tpu.memory_space<vmem>>, vector<1x32xf32>
    %cst = arith.constant dense<0.000000e+00> : vector<16xf32>
    %4 = vector.multi_reduction <add>, %1, %cst [1] : vector<16x32xf32> to vector<16xf32>
    %5 = vector.shape_cast %4 : vector<16xf32> to vector<16x1xf32>
    %cst_6 = arith.constant 3.200000e+01 : f32
    %6 = vector.broadcast %cst_6 : f32 to vector<16x1xf32>
    %7 = arith.divf %5, %6 : vector<16x1xf32>
    %8 = vector.broadcast %7 : vector<16x1xf32> to vector<16x32xf32>
    %9 = arith.subf %1, %8 : vector<16x32xf32>
    %10 = arith.mulf %9, %9 : vector<16x32xf32>
    %cst_7 = arith.constant dense<0.000000e+00> : vector<16xf32>
    %11 = vector.multi_reduction <add>, %10, %cst_7 [1] : vector<16x32xf32> to vector<16xf32>
    %12 = vector.shape_cast %11 : vector<16xf32> to vector<16x1xf32>
    %cst_8 = arith.constant 3.200000e+01 : f32
    %13 = vector.broadcast %cst_8 : f32 to vector<16x1xf32>
    %14 = arith.divf %12, %13 : vector<16x1xf32>
    %15 = vector.broadcast %7 : vector<16x1xf32> to vector<16x32xf32>
    %16 = arith.subf %1, %15 : vector<16x32xf32>
    %cst_9 = arith.constant 9.99999974E-6 : f32
    %17 = vector.broadcast %cst_9 : f32 to vector<16x1xf32>
    %18 = arith.addf %14, %17 : vector<16x1xf32>
    %19 = math.rsqrt %18 : vector<16x1xf32>
    %20 = vector.broadcast %19 : vector<16x1xf32> to vector<16x32xf32>
    %21 = arith.mulf %16, %20 : vector<16x32xf32>
    %22 = vector.broadcast %2 : vector<1x32xf32> to vector<16x32xf32>
    %23 = arith.mulf %21, %22 : vector<16x32xf32>
    %24 = vector.broadcast %3 : vector<1x32xf32> to vector<16x32xf32>
    %25 = arith.addf %23, %24 : vector<16x32xf32>
    %c0_10 = arith.constant 0 : index
    %c0_11 = arith.constant 0 : index
    %c0_12 = arith.constant 0 : index
    %26 = vector.load %arg3[%c0_10, %c0_11, %c0_12] : memref<1x16x32xf32, #tpu.memory_space<vmem>>, vector<1x16x32xf32>
    %27 = vector.shape_cast %26 : vector<1x16x32xf32> to vector<16x32xf32>
    %c0_13 = arith.constant 0 : index
    %c0_14 = arith.constant 0 : index
    %28 = vector.load %arg4[%c0_13, %c0_14] : memref<1x32xf32, #tpu.memory_space<vmem>>, vector<1x32xf32>
    %c0_15 = arith.constant 0 : index
    %c0_16 = arith.constant 0 : index
    %29 = vector.load %arg5[%c0_15, %c0_16] : memref<1x32xf32, #tpu.memory_space<vmem>>, vector<1x32xf32>
    %cst_17 = arith.constant dense<0.000000e+00> : vector<16xf32>
    %30 = vector.multi_reduction <add>, %27, %cst_17 [1] : vector<16x32xf32> to vector<16xf32>
    %31 = vector.shape_cast %30 : vector<16xf32> to vector<16x1xf32>
    %cst_18 = arith.constant 3.200000e+01 : f32
    %32 = vector.broadcast %cst_18 : f32 to vector<16x1xf32>
    %33 = arith.divf %31, %32 : vector<16x1xf32>
    %34 = vector.broadcast %33 : vector<16x1xf32> to vector<16x32xf32>
    %35 = arith.subf %27, %34 : vector<16x32xf32>
    %36 = arith.mulf %35, %35 : vector<16x32xf32>
    %cst_19 = arith.constant dense<0.000000e+00> : vector<16xf32>
    %37 = vector.multi_reduction <add>, %36, %cst_19 [1] : vector<16x32xf32> to vector<16xf32>
    %38 = vector.shape_cast %37 : vector<16xf32> to vector<16x1xf32>
    %cst_20 = arith.constant 3.200000e+01 : f32
    %39 = vector.broadcast %cst_20 : f32 to vector<16x1xf32>
    %40 = arith.divf %38, %39 : vector<16x1xf32>
    %41 = vector.broadcast %33 : vector<16x1xf32> to vector<16x32xf32>
    %42 = arith.subf %27, %41 : vector<16x32xf32>
    %cst_21 = arith.constant 9.99999974E-6 : f32
    %43 = vector.broadcast %cst_21 : f32 to vector<16x1xf32>
    %44 = arith.addf %40, %43 : vector<16x1xf32>
    %45 = math.rsqrt %44 : vector<16x1xf32>
    %46 = vector.broadcast %45 : vector<16x1xf32> to vector<16x32xf32>
    %47 = arith.mulf %42, %46 : vector<16x32xf32>
    %48 = vector.broadcast %28 : vector<1x32xf32> to vector<16x32xf32>
    %49 = arith.mulf %47, %48 : vector<16x32xf32>
    %50 = vector.broadcast %29 : vector<1x32xf32> to vector<16x32xf32>
    %51 = arith.addf %49, %50 : vector<16x32xf32>
    %52 = arith.truncf %25 : vector<16x32xf32> to vector<16x32xbf16>
    %53 = arith.truncf %51 : vector<16x32xf32> to vector<16x32xbf16>
    %c0_22 = arith.constant 0 : index
    %c0_23 = arith.constant 0 : index
    %c0_24 = arith.constant 0 : index
    %54 = vector.load %arg6[%c0_22, %c0_23, %c0_24] : memref<4x32x8xbf16, #tpu.memory_space<vmem>>, vector<1x32x8xbf16>
    %55 = vector.shape_cast %54 : vector<1x32x8xbf16> to vector<32x8xbf16>
    %cst_25 = arith.constant dense<0.000000e+00> : vector<16x8xf32>
    %56 = tpu.matmul %52, %55, %cst_25 {dimension_numbers = #tpu.dot_dimension_numbers<[1], [0], [0], [1], [0, 0, 1, 1], [], []>} : vector<16x32xbf16>, vector<32x8xbf16>, vector<16x8xf32> -> vector<16x8xf32>
    %c0_26 = arith.constant 0 : index
    %c0_27 = arith.constant 0 : index
    %c0_28 = arith.constant 0 : index
    %57 = vector.load %arg7[%c0_26, %c0_27, %c0_28] : memref<4x1x8xf32, #tpu.memory_space<vmem>>, vector<1x1x8xf32>
    %58 = vector.shape_cast %57 : vector<1x1x8xf32> to vector<1x8xf32>
    %59 = vector.broadcast %58 : vector<1x8xf32> to vector<16x8xf32>
    %60 = arith.addf %56, %59 : vector<16x8xf32>
    %61 = arith.truncf %60 : vector<16x8xf32> to vector<16x8xbf16>
    %c0_29 = arith.constant 0 : index
    %c0_30 = arith.constant 0 : index
    %c0_31 = arith.constant 0 : index
    %c0_32 = arith.constant 0 : index
    %62 = vector.load %arg10[%c0_29, %c0_30, %c0_31, %c0_32] : memref<1x4x16x8xbf16, #tpu.memory_space<vmem>>, vector<1x1x16x8xbf16>
    %63 = vector.shape_cast %62 : vector<1x1x16x8xbf16> to vector<16x8xbf16>
    %64 = vector.shape_cast %61 : vector<16x8xbf16> to vector<1x1x16x8xbf16>
    tpu.vector_store %arg10[%c0_29, %c0_30, %c0_31, %c0_32], %64 {strides = array<i32>} : memref<1x4x16x8xbf16, #tpu.memory_space<vmem>>, vector<1x1x16x8xbf16>,
    %c0_33 = arith.constant 0 : index
    %c0_34 = arith.constant 0 : index
    %c0_35 = arith.constant 0 : index
    %65 = vector.load %arg8[%c0_33, %c0_34, %c0_35] : memref<4x32x8xbf16, #tpu.memory_space<vmem>>, vector<1x32x8xbf16>
    %66 = vector.shape_cast %65 : vector<1x32x8xbf16> to vector<32x8xbf16>
    %cst_36 = arith.constant dense<0.000000e+00> : vector<16x8xf32>
    %67 = tpu.matmul %53, %66, %cst_36 {dimension_numbers = #tpu.dot_dimension_numbers<[1], [0], [0], [1], [0, 0, 1, 1], [], []>} : vector<16x32xbf16>, vector<32x8xbf16>, vector<16x8xf32> -> vector<16x8xf32>
    %c0_37 = arith.constant 0 : index
    %c0_38 = arith.constant 0 : index
    %c0_39 = arith.constant 0 : index
    %68 = vector.load %arg9[%c0_37, %c0_38, %c0_39] : memref<4x1x8xf32, #tpu.memory_space<vmem>>, vector<1x1x8xf32>
    %69 = vector.shape_cast %68 : vector<1x1x8xf32> to vector<1x8xf32>
    %70 = vector.broadcast %69 : vector<1x8xf32> to vector<16x8xf32>
    %71 = arith.addf %67, %70 : vector<16x8xf32>
    %72 = arith.truncf %71 : vector<16x8xf32> to vector<16x8xbf16>
    %c0_40 = arith.constant 0 : index
    %c0_41 = arith.constant 0 : index
    %c0_42 = arith.constant 0 : index
    %c0_43 = arith.constant 0 : index
    %73 = vector.load %arg11[%c0_40, %c0_41, %c0_42, %c0_43] : memref<1x4x16x8xbf16, #tpu.memory_space<vmem>>, vector<1x1x16x8xbf16>
    %74 = vector.shape_cast %73 : vector<1x1x16x8xbf16> to vector<16x8xbf16>
    %75 = vector.shape_cast %72 : vector<16x8xbf16> to vector<1x1x16x8xbf16>
    tpu.vector_store %arg11[%c0_40, %c0_41, %c0_42, %c0_43], %75 {strides = array<i32>} : memref<1x4x16x8xbf16, #tpu.memory_space<vmem>>, vector<1x1x16x8xbf16>,
    %c1 = arith.constant 1 : index
    %c0_44 = arith.constant 0 : index
    %c0_45 = arith.constant 0 : index
    %76 = vector.load %arg6[%c1, %c0_44, %c0_45] : memref<4x32x8xbf16, #tpu.memory_space<vmem>>, vector<1x32x8xbf16>
    %77 = vector.shape_cast %76 : vector<1x32x8xbf16> to vector<32x8xbf16>
    %cst_46 = arith.constant dense<0.000000e+00> : vector<16x8xf32>
    %78 = tpu.matmul %52, %77, %cst_46 {dimension_numbers = #tpu.dot_dimension_numbers<[1], [0], [0], [1], [0, 0, 1, 1], [], []>} : vector<16x32xbf16>, vector<32x8xbf16>, vector<16x8xf32> -> vector<16x8xf32>
    %c1_47 = arith.constant 1 : index
    %c0_48 = arith.constant 0 : index
    %c0_49 = arith.constant 0 : index
    %79 = vector.load %arg7[%c1_47, %c0_48, %c0_49] : memref<4x1x8xf32, #tpu.memory_space<vmem>>, vector<1x1x8xf32>
    %80 = vector.shape_cast %79 : vector<1x1x8xf32> to vector<1x8xf32>
    %81 = vector.broadcast %80 : vector<1x8xf32> to vector<16x8xf32>
    %82 = arith.addf %78, %81 : vector<16x8xf32>
    %83 = arith.truncf %82 : vector<16x8xf32> to vector<16x8xbf16>
    %c0_50 = arith.constant 0 : index
    %c1_51 = arith.constant 1 : index
    %c0_52 = arith.constant 0 : index
    %c0_53 = arith.constant 0 : index
    %84 = vector.load %arg10[%c0_50, %c1_51, %c0_52, %c0_53] : memref<1x4x16x8xbf16, #tpu.memory_space<vmem>>, vector<1x1x16x8xbf16>
    %85 = vector.shape_cast %84 : vector<1x1x16x8xbf16> to vector<16x8xbf16>
    %86 = vector.shape_cast %83 : vector<16x8xbf16> to vector<1x1x16x8xbf16>
    tpu.vector_store %arg10[%c0_50, %c1_51, %c0_52, %c0_53], %86 {strides = array<i32>} : memref<1x4x16x8xbf16, #tpu.memory_space<vmem>>, vector<1x1x16x8xbf16>,
    %c1_54 = arith.constant 1 : index
    %c0_55 = arith.constant 0 : index
    %c0_56 = arith.constant 0 : index
    %87 = vector.load %arg8[%c1_54, %c0_55, %c0_56] : memref<4x32x8xbf16, #tpu.memory_space<vmem>>, vector<1x32x8xbf16>
    %88 = vector.shape_cast %87 : vector<1x32x8xbf16> to vector<32x8xbf16>
    %cst_57 = arith.constant dense<0.000000e+00> : vector<16x8xf32>
    %89 = tpu.matmul %53, %88, %cst_57 {dimension_numbers = #tpu.dot_dimension_numbers<[1], [0], [0], [1], [0, 0, 1, 1], [], []>} : vector<16x32xbf16>, vector<32x8xbf16>, vector<16x8xf32> -> vector<16x8xf32>
    %c1_58 = arith.constant 1 : index
    %c0_59 = arith.constant 0 : index
    %c0_60 = arith.constant 0 : index
    %90 = vector.load %arg9[%c1_58, %c0_59, %c0_60] : memref<4x1x8xf32, #tpu.memory_space<vmem>>, vector<1x1x8xf32>
    %91 = vector.shape_cast %90 : vector<1x1x8xf32> to vector<1x8xf32>
    %92 = vector.broadcast %91 : vector<1x8xf32> to vector<16x8xf32>
    %93 = arith.addf %89, %92 : vector<16x8xf32>
    %94 = arith.truncf %93 : vector<16x8xf32> to vector<16x8xbf16>
    %c0_61 = arith.constant 0 : index
    %c1_62 = arith.constant 1 : index
    %c0_63 = arith.constant 0 : index
    %c0_64 = arith.constant 0 : index
    %95 = vector.load %arg11[%c0_61, %c1_62, %c0_63, %c0_64] : memref<1x4x16x8xbf16, #tpu.memory_space<vmem>>, vector<1x1x16x8xbf16>
    %96 = vector.shape_cast %95 : vector<1x1x16x8xbf16> to vector<16x8xbf16>
    %97 = vector.shape_cast %94 : vector<16x8xbf16> to vector<1x1x16x8xbf16>
    tpu.vector_store %arg11[%c0_61, %c1_62, %c0_63, %c0_64], %97 {strides = array<i32>} : memref<1x4x16x8xbf16, #tpu.memory_space<vmem>>, vector<1x1x16x8xbf16>,
    %c2 = arith.constant 2 : index
    %c0_65 = arith.constant 0 : index
    %c0_66 = arith.constant 0 : index
    %98 = vector.load %arg6[%c2, %c0_65, %c0_66] : memref<4x32x8xbf16, #tpu.memory_space<vmem>>, vector<1x32x8xbf16>
    %99 = vector.shape_cast %98 : vector<1x32x8xbf16> to vector<32x8xbf16>
    %cst_67 = arith.constant dense<0.000000e+00> : vector<16x8xf32>
    %100 = tpu.matmul %52, %99, %cst_67 {dimension_numbers = #tpu.dot_dimension_numbers<[1], [0], [0], [1], [0, 0, 1, 1], [], []>} : vector<16x32xbf16>, vector<32x8xbf16>, vector<16x8xf32> -> vector<16x8xf32>
    %c2_68 = arith.constant 2 : index
    %c0_69 = arith.constant 0 : index
    %c0_70 = arith.constant 0 : index
    %101 = vector.load %arg7[%c2_68, %c0_69, %c0_70] : memref<4x1x8xf32, #tpu.memory_space<vmem>>, vector<1x1x8xf32>
    %102 = vector.shape_cast %101 : vector<1x1x8xf32> to vector<1x8xf32>
    %103 = vector.broadcast %102 : vector<1x8xf32> to vector<16x8xf32>
    %104 = arith.addf %100, %103 : vector<16x8xf32>
    %105 = arith.truncf %104 : vector<16x8xf32> to vector<16x8xbf16>
    %c0_71 = arith.constant 0 : index
    %c2_72 = arith.constant 2 : index
    %c0_73 = arith.constant 0 : index
    %c0_74 = arith.constant 0 : index
    %106 = vector.load %arg10[%c0_71, %c2_72, %c0_73, %c0_74] : memref<1x4x16x8xbf16, #tpu.memory_space<vmem>>, vector<1x1x16x8xbf16>
    %107 = vector.shape_cast %106 : vector<1x1x16x8xbf16> to vector<16x8xbf16>
    %108 = vector.shape_cast %105 : vector<16x8xbf16> to vector<1x1x16x8xbf16>
    tpu.vector_store %arg10[%c0_71, %c2_72, %c0_73, %c0_74], %108 {strides = array<i32>} : memref<1x4x16x8xbf16, #tpu.memory_space<vmem>>, vector<1x1x16x8xbf16>,
    %c2_75 = arith.constant 2 : index
    %c0_76 = arith.constant 0 : index
    %c0_77 = arith.constant 0 : index
    %109 = vector.load %arg8[%c2_75, %c0_76, %c0_77] : memref<4x32x8xbf16, #tpu.memory_space<vmem>>, vector<1x32x8xbf16>
    %110 = vector.shape_cast %109 : vector<1x32x8xbf16> to vector<32x8xbf16>
    %cst_78 = arith.constant dense<0.000000e+00> : vector<16x8xf32>
    %111 = tpu.matmul %53, %110, %cst_78 {dimension_numbers = #tpu.dot_dimension_numbers<[1], [0], [0], [1], [0, 0, 1, 1], [], []>} : vector<16x32xbf16>, vector<32x8xbf16>, vector<16x8xf32> -> vector<16x8xf32>
    %c2_79 = arith.constant 2 : index
    %c0_80 = arith.constant 0 : index
    %c0_81 = arith.constant 0 : index
    %112 = vector.load %arg9[%c2_79, %c0_80, %c0_81] : memref<4x1x8xf32, #tpu.memory_space<vmem>>, vector<1x1x8xf32>
    %113 = vector.shape_cast %112 : vector<1x1x8xf32> to vector<1x8xf32>
    %114 = vector.broadcast %113 : vector<1x8xf32> to vector<16x8xf32>
    %115 = arith.addf %111, %114 : vector<16x8xf32>
    %116 = arith.truncf %115 : vector<16x8xf32> to vector<16x8xbf16>
    %c0_82 = arith.constant 0 : index
    %c2_83 = arith.constant 2 : index
    %c0_84 = arith.constant 0 : index
    %c0_85 = arith.constant 0 : index
    %117 = vector.load %arg11[%c0_82, %c2_83, %c0_84, %c0_85] : memref<1x4x16x8xbf16, #tpu.memory_space<vmem>>, vector<1x1x16x8xbf16>
    %118 = vector.shape_cast %117 : vector<1x1x16x8xbf16> to vector<16x8xbf16>
    %119 = vector.shape_cast %116 : vector<16x8xbf16> to vector<1x1x16x8xbf16>
    tpu.vector_store %arg11[%c0_82, %c2_83, %c0_84, %c0_85], %119 {strides = array<i32>} : memref<1x4x16x8xbf16, #tpu.memory_space<vmem>>, vector<1x1x16x8xbf16>,
    %c3 = arith.constant 3 : index
    %c0_86 = arith.constant 0 : index
    %c0_87 = arith.constant 0 : index
    %120 = vector.load %arg6[%c3, %c0_86, %c0_87] : memref<4x32x8xbf16, #tpu.memory_space<vmem>>, vector<1x32x8xbf16>
    %121 = vector.shape_cast %120 : vector<1x32x8xbf16> to vector<32x8xbf16>
    %cst_88 = arith.constant dense<0.000000e+00> : vector<16x8xf32>
    %122 = tpu.matmul %52, %121, %cst_88 {dimension_numbers = #tpu.dot_dimension_numbers<[1], [0], [0], [1], [0, 0, 1, 1], [], []>} : vector<16x32xbf16>, vector<32x8xbf16>, vector<16x8xf32> -> vector<16x8xf32>
    %c3_89 = arith.constant 3 : index
    %c0_90 = arith.constant 0 : index
    %c0_91 = arith.constant 0 : index
    %123 = vector.load %arg7[%c3_89, %c0_90, %c0_91] : memref<4x1x8xf32, #tpu.memory_space<vmem>>, vector<1x1x8xf32>
    %124 = vector.shape_cast %123 : vector<1x1x8xf32> to vector<1x8xf32>
    %125 = vector.broadcast %124 : vector<1x8xf32> to vector<16x8xf32>
    %126 = arith.addf %122, %125 : vector<16x8xf32>
    %127 = arith.truncf %126 : vector<16x8xf32> to vector<16x8xbf16>
    %c0_92 = arith.constant 0 : index
    %c3_93 = arith.constant 3 : index
    %c0_94 = arith.constant 0 : index
    %c0_95 = arith.constant 0 : index
    %128 = vector.load %arg10[%c0_92, %c3_93, %c0_94, %c0_95] : memref<1x4x16x8xbf16, #tpu.memory_space<vmem>>, vector<1x1x16x8xbf16>
    %129 = vector.shape_cast %128 : vector<1x1x16x8xbf16> to vector<16x8xbf16>
    %130 = vector.shape_cast %127 : vector<16x8xbf16> to vector<1x1x16x8xbf16>
    tpu.vector_store %arg10[%c0_92, %c3_93, %c0_94, %c0_95], %130 {strides = array<i32>} : memref<1x4x16x8xbf16, #tpu.memory_space<vmem>>, vector<1x1x16x8xbf16>,
    %c3_96 = arith.constant 3 : index
    %c0_97 = arith.constant 0 : index
    %c0_98 = arith.constant 0 : index
    %131 = vector.load %arg8[%c3_96, %c0_97, %c0_98] : memref<4x32x8xbf16, #tpu.memory_space<vmem>>, vector<1x32x8xbf16>
    %132 = vector.shape_cast %131 : vector<1x32x8xbf16> to vector<32x8xbf16>
    %cst_99 = arith.constant dense<0.000000e+00> : vector<16x8xf32>
    %133 = tpu.matmul %53, %132, %cst_99 {dimension_numbers = #tpu.dot_dimension_numbers<[1], [0], [0], [1], [0, 0, 1, 1], [], []>} : vector<16x32xbf16>, vector<32x8xbf16>, vector<16x8xf32> -> vector<16x8xf32>
    %c3_100 = arith.constant 3 : index
    %c0_101 = arith.constant 0 : index
    %c0_102 = arith.constant 0 : index
    %134 = vector.load %arg9[%c3_100, %c0_101, %c0_102] : memref<4x1x8xf32, #tpu.memory_space<vmem>>, vector<1x1x8xf32>
    %135 = vector.shape_cast %134 : vector<1x1x8xf32> to vector<1x8xf32>
    %136 = vector.broadcast %135 : vector<1x8xf32> to vector<16x8xf32>
    %137 = arith.addf %133, %136 : vector<16x8xf32>
    %138 = arith.truncf %137 : vector<16x8xf32> to vector<16x8xbf16>
    %c0_103 = arith.constant 0 : index
    %c3_104 = arith.constant 3 : index
    %c0_105 = arith.constant 0 : index
    %c0_106 = arith.constant 0 : index
    %139 = vector.load %arg11[%c0_103, %c3_104, %c0_105, %c0_106] : memref<1x4x16x8xbf16, #tpu.memory_space<vmem>>, vector<1x1x16x8xbf16>
    %140 = vector.shape_cast %139 : vector<1x1x16x8xbf16> to vector<16x8xbf16>
    %141 = vector.shape_cast %138 : vector<16x8xbf16> to vector<1x1x16x8xbf16>
    tpu.vector_store %arg11[%c0_103, %c3_104, %c0_105, %c0_106], %141 {strides = array<i32>} : memref<1x4x16x8xbf16, #tpu.memory_space<vmem>>, vector<1x1x16x8xbf16>,
    return
  }
  func.func @transform_0(%arg0: i32, %arg1: i32) -> (i32, i32, i32) {
    %c0_i32 = arith.constant 0 : i32
    %c0_i32_0 = arith.constant 0 : i32
    return %arg0, %arg1, %c0_i32 : i32, i32, i32
  }
  func.func @transform_1(%arg0: i32, %arg1: i32) -> (i32, i32, i32) {
    %c0_i32 = arith.constant 0 : i32
    %c0_i32_0 = arith.constant 0 : i32
    return %arg0, %arg1, %c0_i32 : i32, i32, i32
  }
  func.func @transform_2(%arg0: i32, %arg1: i32) -> (i32, i32) {
    %c0_i32 = arith.constant 0 : i32
    %c0_i32_0 = arith.constant 0 : i32
    %c0_i32_1 = arith.constant 0 : i32
    return %c0_i32, %c0_i32_0 : i32, i32
  }
  func.func @transform_3(%arg0: i32, %arg1: i32) -> (i32, i32) {
    %c0_i32 = arith.constant 0 : i32
    %c0_i32_0 = arith.constant 0 : i32
    %c0_i32_1 = arith.constant 0 : i32
    return %c0_i32, %c0_i32_0 : i32, i32
  }
  func.func @transform_4(%arg0: i32, %arg1: i32) -> (i32, i32, i32) {
    %c0_i32 = arith.constant 0 : i32
    %c0_i32_0 = arith.constant 0 : i32
    %c0_i32_1 = arith.constant 0 : i32
    %c0_i32_2 = arith.constant 0 : i32
    return %c0_i32, %c0_i32_0, %c0_i32_1 : i32, i32, i32
  }
  func.func @transform_5(%arg0: i32, %arg1: i32) -> (i32, i32, i32) {
    %c0_i32 = arith.constant 0 : i32
    %c0_i32_0 = arith.constant 0 : i32
    %c0_i32_1 = arith.constant 0 : i32
    %c0_i32_2 = arith.constant 0 : i32
    return %c0_i32, %c0_i32_0, %c0_i32_1 : i32, i32, i32
  }
  func.func @transform_6(%arg0: i32, %arg1: i32) -> (i32, i32, i32) {
    %c0_i32 = arith.constant 0 : i32
    %c0_i32_0 = arith.constant 0 : i32
    %c0_i32_1 = arith.constant 0 : i32
    %c0_i32_2 = arith.constant 0 : i32
    return %c0_i32, %c0_i32_0, %c0_i32_1 : i32, i32, i32
  }
  func.func @transform_7(%arg0: i32, %arg1: i32) -> (i32, i32, i32) {
    %c0_i32 = arith.constant 0 : i32
    %c0_i32_0 = arith.constant 0 : i32
    %c0_i32_1 = arith.constant 0 : i32
    %c0_i32_2 = arith.constant 0 : i32
    return %c0_i32, %c0_i32_0, %c0_i32_1 : i32, i32, i32
  }
  func.func @transform_8(%arg0: i32, %arg1: i32) -> (i32, i32, i32, i32) {
    %c0_i32 = arith.constant 0 : i32
    %c0_i32_0 = arith.constant 0 : i32
    %c0_i32_1 = arith.constant 0 : i32
    return %arg0, %c0_i32, %arg1, %c0_i32_0 : i32, i32, i32, i32
  }
  func.func @transform_9(%arg0: i32, %arg1: i32) -> (i32, i32, i32, i32) {
    %c0_i32 = arith.constant 0 : i32
    %c0_i32_0 = arith.constant 0 : i32
    %c0_i32_1 = arith.constant 0 : i32
    return %arg0, %c0_i32, %arg1, %c0_i32_0 : i32, i32, i32, i32
  }
}

</mosaic_0001>

<llo_original>
// kernel: tpu_custom_call.1
$region0: #{tpu_custom_call.1}
  #allocation0 [shape = 'u32[]', space=smem, size = 0x4, offset = 0x4, fixed_abs, tag = 'smem constant byte address 0x4 - core index']
  #allocation1 [shape = 'u32[144,128]{1,0:T(1,128)}', space=vmem, size = 0x12000, scoped, tag = 'internal scratch']
  %s0 = inlined_call_operand.vmem [shape: f32[2,32,32], index: 0, kind: input, shape index: {}]
  %s1 = inlined_call_operand.vmem [shape: f32[2,32,32], index: 1, kind: input, shape index: {}]
  %s2 = inlined_call_operand.vmem [shape: f32[1,32], index: 2, kind: input, shape index: {}]
  %s3 = inlined_call_operand.vmem [shape: f32[1,32], index: 3, kind: input, shape index: {}]
  %s4 = inlined_call_operand.vmem [shape: bf16[4,32,8], index: 4, kind: input, shape index: {}]
  %s5 = inlined_call_operand.vmem [shape: f32[4,1,8], index: 5, kind: input, shape index: {}]
  %s6 = inlined_call_operand.vmem [shape: bf16[4,32,8], index: 6, kind: input, shape index: {}]
  %s7 = inlined_call_operand.vmem [shape: f32[4,1,8], index: 7, kind: input, shape index: {}]
  %s8 = inlined_call_operand.vmem [shape: bf16[2,4,32,8], index: 8, kind: output, shape index: {0}]
  %s9 = inlined_call_operand.vmem [shape: bf16[2,4,32,8], index: 9, kind: output, shape index: {1}]
  %10 = xla_tuple %s8, %s9
  %s11 = sld [smem:[#allocation0]]
  $region147: #{tpu_custom_call.1} parent=0
    _
  %s13 = ssub.s32 1, %s11
  %s14 = scalar_select 0, %s13, %s11
  $region1: #{tpu_custom_call.1} parent=0
    #allocation2 [shape = 'u8[32768]{0}', space=vmem, size = 0x8000, scoped, tag = 'output window, operand 0']
    #allocation3 [shape = 'u8[32768]{0}', space=vmem, size = 0x8000, scoped, tag = 'output window, operand 1']
    loop: start=0, step=1, limit=6
    $region2: #{tpu_custom_call.1} parent=1 // loop_pre_header
      _
    $region3: #{tpu_custom_call.1} parent=1 // loop_header
      %s16 = sphi 0, %s20
      %p17 = scmp.ge.s32.totalorder %s16, 6
      %s23 = sphi 0, %s35
      %s24 = sphi 0, %s31
      %s25 = sphi 0, %s23
      %s26 = sphi 0, %s24
      %s27 = sphi 0, %s25
      %s28 = sphi 0, %s26
      %s40 = sphi 0, %s42
      %s43 = sphi 0, %s40
      %s44 = sphi 0, %s43
      %s60 = sphi 0, %s44
      %s68 = sphi 0, %s70
      %s71 = sphi 0, %s68
      %s72 = sphi 0, %s71
      %s88 = sphi 0, %s72
      %s92 = sphi 0, %s92
      %s94 = sphi 0, %s92
      %s95 = sphi 0, %s94
      %s109 = sphi 0, %s95
      %s113 = sphi 0, %s113
      %s115 = sphi 0, %s113
      %s116 = sphi 0, %s115
      %s130 = sphi 0, %s116
      %s134 = sphi 0, %s134
      %s136 = sphi 0, %s134
      %s137 = sphi 0, %s136
      %s151 = sphi 0, %s137
      %s155 = sphi 0, %s155
      %s157 = sphi 0, %s155
      %s158 = sphi 0, %s157
      %s172 = sphi 0, %s158
      %s176 = sphi 0, %s176
      %s178 = sphi 0, %s176
      %s179 = sphi 0, %s178
      %s193 = sphi 0, %s179
      %s197 = sphi 0, %s197
      %s199 = sphi 0, %s197
      %s200 = sphi 0, %s199
      %s214 = sphi 0, %s200
      %s222 = sphi 0, %s224
      %s225 = sphi 0, %s222
      %s226 = sphi 0, %s225
      %s242 = sphi 0, %s226
      %s250 = sphi 0, %s252
      %s253 = sphi 0, %s250
      %s254 = sphi 0, %s253
      %s270 = sphi 0, %s254
    $region4: #{tpu_custom_call.1} parent=1 // loop_header_branch
      %19 = sbr.rel (%p17) target = $region8
    $region5: #{tpu_custom_call.1} parent=1 // loop_body
      %s21 = ssub.s32 %s16, 1
      %s22 = ssub.s32 %s16, 2
      %s29 = sadd.s32 1, %s24
      %p30 = scmp.ge.s32.totalorder %s29, 2
      %s31 = scalar_select %p30, 0, %s29
      %s32 = sadd.s32 1, %s23
      %s33 = scalar_select %p30, %s32, %s23
      %p34 = scmp.ge.s32.totalorder %s33, 2
      %s35 = scalar_select %p34, 0, %s33
      %s36 = ssub.s32 %s23, %s35
      %s37 = ssub.s32 %s24, %s31
      %s38 = sor.u32 %s36, %s37
      %p39 = scmp.eq.s32.totalorder %s38, 0
      %s41 = sadd.s32 %s40, 1
      %s42 = scalar_select %p39, %s40, %s41
      %p45 = pneg %p39
      %p46 = scmp.eq.s32.totalorder %s16, 3
      %p47 = por %p45, %p46
      %p48 = scmp.ne.s32.totalorder %s40, %s43
      %p49 = scmp.eq.s32.totalorder %s16, 0
      %p50 = por %p48, %p49
      %p51 = scmp.ne.s32.totalorder %s40, %s43
      %p52 = scmp.eq.s32.totalorder %s21, 3
      %p53 = por %p51, %p52
      %p54 = scmp.ne.s32.totalorder %s43, %s44
      %p55 = scmp.eq.s32.totalorder %s21, 0
      %p56 = por %p54, %p55
      %p57 = scmp.ne.s32.totalorder %s43, %s44
      %p58 = scmp.eq.s32.totalorder %s22, 3
      %p59 = por %p57, %p58
      %p61 = scmp.ne.s32.totalorder %s44, %s60
      %p62 = scmp.eq.s32.totalorder %s22, 0
      %p63 = por %p61, %p62
      %s64 = ssub.s32 %s23, %s35
      %s65 = ssub.s32 %s24, %s31
      %s66 = sor.u32 %s64, %s65
      %p67 = scmp.eq.s32.totalorder %s66, 0
      %s69 = sadd.s32 %s68, 1
      %s70 = scalar_select %p67, %s68, %s69
      %p73 = pneg %p67
      %p74 = scmp.eq.s32.totalorder %s16, 3
      %p75 = por %p73, %p74
      %p76 = scmp.ne.s32.totalorder %s68, %s71
      %p77 = scmp.eq.s32.totalorder %s16, 0
      %p78 = por %p76, %p77
      %p79 = scmp.ne.s32.totalorder %s68, %s71
      %p80 = scmp.eq.s32.totalorder %s21, 3
      %p81 = por %p79, %p80
      %p82 = scmp.ne.s32.totalorder %s71, %s72
      %p83 = scmp.eq.s32.totalorder %s21, 0
      %p84 = por %p82, %p83
      %p85 = scmp.ne.s32.totalorder %s71, %s72
      %p86 = scmp.eq.s32.totalorder %s22, 3
      %p87 = por %p85, %p86
      %p89 = scmp.ne.s32.totalorder %s72, %s88
      %p90 = scmp.eq.s32.totalorder %s22, 0
      %p91 = por %p89, %p90
      %s93 = sadd.s32 %s92, 1
      %p96 = scmp.eq.s32.totalorder %s16, 3
      %p97 = scmp.ne.s32.totalorder %s92, %s94
      %p98 = scmp.eq.s32.totalorder %s16, 0
      %p99 = por %p97, %p98
      %p100 = scmp.ne.s32.totalorder %s92, %s94
      %p101 = scmp.eq.s32.totalorder %s21, 3
      %p102 = por %p100, %p101
      %p103 = scmp.ne.s32.totalorder %s94, %s95
      %p104 = scmp.eq.s32.totalorder %s21, 0
      %p105 = por %p103, %p104
      %p106 = scmp.ne.s32.totalorder %s94, %s95
      %p107 = scmp.eq.s32.totalorder %s22, 3
      %p108 = por %p106, %p107
      %p110 = scmp.ne.s32.totalorder %s95, %s109
      %p111 = scmp.eq.s32.totalorder %s22, 0
      %p112 = por %p110, %p111
      %s114 = sadd.s32 %s113, 1
      %p117 = scmp.eq.s32.totalorder %s16, 3
      %p118 = scmp.ne.s32.totalorder %s113, %s115
      %p119 = scmp.eq.s32.totalorder %s16, 0
      %p120 = por %p118, %p119
      %p121 = scmp.ne.s32.totalorder %s113, %s115
      %p122 = scmp.eq.s32.totalorder %s21, 3
      %p123 = por %p121, %p122
      %p124 = scmp.ne.s32.totalorder %s115, %s116
      %p125 = scmp.eq.s32.totalorder %s21, 0
      %p126 = por %p124, %p125
      %p127 = scmp.ne.s32.totalorder %s115, %s116
      %p128 = scmp.eq.s32.totalorder %s22, 3
      %p129 = por %p127, %p128
      %p131 = scmp.ne.s32.totalorder %s116, %s130
      %p132 = scmp.eq.s32.totalorder %s22, 0
      %p133 = por %p131, %p132
      %s135 = sadd.s32 %s134, 1
      %p138 = scmp.eq.s32.totalorder %s16, 3
      %p139 = scmp.ne.s32.totalorder %s134, %s136
      %p140 = scmp.eq.s32.totalorder %s16, 0
      %p141 = por %p139, %p140
      %p142 = scmp.ne.s32.totalorder %s134, %s136
      %p143 = scmp.eq.s32.totalorder %s21, 3
      %p144 = por %p142, %p143
      %p145 = scmp.ne.s32.totalorder %s136, %s137
      %p146 = scmp.eq.s32.totalorder %s21, 0
      %p147 = por %p145, %p146
      %p148 = scmp.ne.s32.totalorder %s136, %s137
      %p149 = scmp.eq.s32.totalorder %s22, 3
      %p150 = por %p148, %p149
      %p152 = scmp.ne.s32.totalorder %s137, %s151
      %p153 = scmp.eq.s32.totalorder %s22, 0
      %p154 = por %p152, %p153
      %s156 = sadd.s32 %s155, 1
      %p159 = scmp.eq.s32.totalorder %s16, 3
      %p160 = scmp.ne.s32.totalorder %s155, %s157
      %p161 = scmp.eq.s32.totalorder %s16, 0
      %p162 = por %p160, %p161
      %p163 = scmp.ne.s32.totalorder %s155, %s157
      %p164 = scmp.eq.s32.totalorder %s21, 3
      %p165 = por %p163, %p164
      %p166 = scmp.ne.s32.totalorder %s157, %s158
      %p167 = scmp.eq.s32.totalorder %s21, 0
      %p168 = por %p166, %p167
      %p169 = scmp.ne.s32.totalorder %s157, %s158
      %p170 = scmp.eq.s32.totalorder %s22, 3
      %p171 = por %p169, %p170
      %p173 = scmp.ne.s32.totalorder %s158, %s172
      %p174 = scmp.eq.s32.totalorder %s22, 0
      %p175 = por %p173, %p174
      %s177 = sadd.s32 %s176, 1
      %p180 = scmp.eq.s32.totalorder %s16, 3
      %p181 = scmp.ne.s32.totalorder %s176, %s178
      %p182 = scmp.eq.s32.totalorder %s16, 0
      %p183 = por %p181, %p182
      %p184 = scmp.ne.s32.totalorder %s176, %s178
      %p185 = scmp.eq.s32.totalorder %s21, 3
      %p186 = por %p184, %p185
      %p187 = scmp.ne.s32.totalorder %s178, %s179
      %p188 = scmp.eq.s32.totalorder %s21, 0
      %p189 = por %p187, %p188
      %p190 = scmp.ne.s32.totalorder %s178, %s179
      %p191 = scmp.eq.s32.totalorder %s22, 3
      %p192 = por %p190, %p191
      %p194 = scmp.ne.s32.totalorder %s179, %s193
      %p195 = scmp.eq.s32.totalorder %s22, 0
      %p196 = por %p194, %p195
      %s198 = sadd.s32 %s197, 1
      %p201 = scmp.eq.s32.totalorder %s16, 3
      %p202 = scmp.ne.s32.totalorder %s197, %s199
      %p203 = scmp.eq.s32.totalorder %s16, 0
      %p204 = por %p202, %p203
      %p205 = scmp.ne.s32.totalorder %s197, %s199
      %p206 = scmp.eq.s32.totalorder %s21, 3
      %p207 = por %p205, %p206
      %p208 = scmp.ne.s32.totalorder %s199, %s200
      %p209 = scmp.eq.s32.totalorder %s21, 0
      %p210 = por %p208, %p209
      %p211 = scmp.ne.s32.totalorder %s199, %s200
      %p212 = scmp.eq.s32.totalorder %s22, 3
      %p213 = por %p211, %p212
      %p215 = scmp.ne.s32.totalorder %s200, %s214
      %p216 = scmp.eq.s32.totalorder %s22, 0
      %p217 = por %p215, %p216
      %s218 = ssub.s32 %s23, %s35
      %s219 = ssub.s32 %s24, %s31
      %s220 = sor.u32 %s218, %s219
      %p221 = scmp.eq.s32.totalorder %s220, 0
      %s223 = sadd.s32 %s222, 1
      %s224 = scalar_select %p221, %s222, %s223
      %p227 = pneg %p221
      %p228 = scmp.eq.s32.totalorder %s16, 3
      %p229 = por %p227, %p228
      %p230 = scmp.ne.s32.totalorder %s222, %s225
      %p231 = scmp.eq.s32.totalorder %s16, 0
      %p232 = por %p230, %p231
      %p233 = scmp.ne.s32.totalorder %s222, %s225
      %p234 = scmp.eq.s32.totalorder %s21, 3
      %p235 = por %p233, %p234
      %p236 = scmp.ne.s32.totalorder %s225, %s226
      %p237 = scmp.eq.s32.totalorder %s21, 0
      %p238 = por %p236, %p237
      %p239 = scmp.ne.s32.totalorder %s225, %s226
      %p240 = scmp.eq.s32.totalorder %s22, 3
      %p241 = por %p239, %p240
      %p243 = scmp.ne.s32.totalorder %s226, %s242
      %p244 = scmp.eq.s32.totalorder %s22, 0
      %p245 = por %p243, %p244
      %s246 = ssub.s32 %s23, %s35
      %s247 = ssub.s32 %s24, %s31
      %s248 = sor.u32 %s246, %s247
      %p249 = scmp.eq.s32.totalorder %s248, 0
      %s251 = sadd.s32 %s250, 1
      %s252 = scalar_select %p249, %s250, %s251
      %p255 = pneg %p249
      %p256 = scmp.eq.s32.totalorder %s16, 3
      %p257 = por %p255, %p256
      %p258 = scmp.ne.s32.totalorder %s250, %s253
      %p259 = scmp.eq.s32.totalorder %s16, 0
      %p260 = por %p258, %p259
      %p261 = scmp.ne.s32.totalorder %s250, %s253
      %p262 = scmp.eq.s32.totalorder %s21, 3
      %p263 = por %p261, %p262
      %p264 = scmp.ne.s32.totalorder %s253, %s254
      %p265 = scmp.eq.s32.totalorder %s21, 0
      %p266 = por %p264, %p265
      %p267 = scmp.ne.s32.totalorder %s253, %s254
      %p268 = scmp.eq.s32.totalorder %s22, 3
      %p269 = por %p267, %p268
      %p271 = scmp.ne.s32.totalorder %s254, %s270
      %p272 = scmp.eq.s32.totalorder %s22, 0
      %p273 = por %p271, %p272
      %p274 = scmp.le.s32.totalorder 1, %s16
      %p275 = scmp.lt.s32.totalorder %s16, 5
      %p276 = pnand %p274, %p275
      %p277 = pneg %p276
      // Predicated region
      $region9: #{tpu_custom_call.1} parent=5 // pred_check
        _
      $region10: #{tpu_custom_call.1} parent=5 // pred_check_branch
        %279 = sbr.rel (%p276) target = $region12
      $region11: #{tpu_custom_call.1} parent=5 // pred_region
        %s280 = ssub.s32 %s16, 1
        // Predicated region
        $region13: #{tpu_custom_call.1} parent=11 // pred_check
          %p281 = pneg %p105
        $region14: #{tpu_custom_call.1} parent=11 // pred_check_branch
          %283 = sbr.rel (%p281) target = $region16
        $region15: #{tpu_custom_call.1} parent=11 // pred_region
          _
        $region16: #{tpu_custom_call.1} parent=11 // pred_fallthru
          _
        // Predicated region
        $region17: #{tpu_custom_call.1} parent=11 // pred_check
          %p284 = pneg %p126
        $region18: #{tpu_custom_call.1} parent=11 // pred_check_branch
          %286 = sbr.rel (%p284) target = $region20
        $region19: #{tpu_custom_call.1} parent=11 // pred_region
          _
        $region20: #{tpu_custom_call.1} parent=11 // pred_fallthru
          _
        // Predicated region
        $region21: #{tpu_custom_call.1} parent=11 // pred_check
          %p287 = pneg %p147
        $region22: #{tpu_custom_call.1} parent=11 // pred_check_branch
          %289 = sbr.rel (%p287) target = $region24
        $region23: #{tpu_custom_call.1} parent=11 // pred_region
          _
        $region24: #{tpu_custom_call.1} parent=11 // pred_fallthru
          _
        // Predicated region
        $region25: #{tpu_custom_call.1} parent=11 // pred_check
          %p290 = pneg %p168
        $region26: #{tpu_custom_call.1} parent=11 // pred_check_branch
          %292 = sbr.rel (%p290) target = $region28
        $region27: #{tpu_custom_call.1} parent=11 // pred_region
          _
        $region28: #{tpu_custom_call.1} parent=11 // pred_fallthru
          _
        // Predicated region
        $region29: #{tpu_custom_call.1} parent=11 // pred_check
          %p293 = pneg %p189
        $region30: #{tpu_custom_call.1} parent=11 // pred_check_branch
          %295 = sbr.rel (%p293) target = $region32
        $region31: #{tpu_custom_call.1} parent=11 // pred_region
          _
        $region32: #{tpu_custom_call.1} parent=11 // pred_fallthru
          _
        // Predicated region
        $region33: #{tpu_custom_call.1} parent=11 // pred_check
          %p296 = pneg %p210
        $region34: #{tpu_custom_call.1} parent=11 // pred_check_branch
          %298 = sbr.rel (%p296) target = $region36
        $region35: #{tpu_custom_call.1} parent=11 // pred_region
          _
        $region36: #{tpu_custom_call.1} parent=11 // pred_fallthru
          _
      $region12: #{tpu_custom_call.1} parent=5 // pred_fallthru
        _
      %p299 = scmp.lt.s32.totalorder %s16, 4
      // Predicated region
      $region37: #{tpu_custom_call.1} parent=5 // pred_check
        %p300 = pneg %p299
      $region38: #{tpu_custom_call.1} parent=5 // pred_check_branch
        %302 = sbr.rel (%p300) target = $region40
      $region39: #{tpu_custom_call.1} parent=5 // pred_region
        // Predicated region
        $region41: #{tpu_custom_call.1} parent=39 // pred_check
          %p303 = pneg %p50
        $region42: #{tpu_custom_call.1} parent=39 // pred_check_branch
          %305 = sbr.rel (%p303) target = $region44
        $region43: #{tpu_custom_call.1} parent=39 // pred_region
          %s306 = smul.u32 2, %s24
          %p307 = scmp.lt.s32.totalorder %s23, 1
          %s308 = scalar_select %p307, %s23, 1
          %p309 = scmp.lt.s32.totalorder %s306, 3
          %s310 = scalar_select %p309, %s306, 3
          %s311 = smul.addr %s308, 4
          %s312 = sadd.s32 %s310, %s311
          %s313 = smul.addr %s312, 8
          %s314 = scalar_lea.vmem %s0, %s313
          %s315 = smul.u32 2, %s24
        $region44: #{tpu_custom_call.1} parent=39 // pred_fallthru
          _
        // Predicated region
        $region45: #{tpu_custom_call.1} parent=39 // pred_check
          %p316 = pneg %p78
        $region46: #{tpu_custom_call.1} parent=39 // pred_check_branch
          %318 = sbr.rel (%p316) target = $region48
        $region47: #{tpu_custom_call.1} parent=39 // pred_region
          %s319 = smul.u32 2, %s24
          %p320 = scmp.lt.s32.totalorder %s23, 1
          %s321 = scalar_select %p320, %s23, 1
          %p322 = scmp.lt.s32.totalorder %s319, 3
          %s323 = scalar_select %p322, %s319, 3
          %s324 = smul.addr %s321, 4
          %s325 = sadd.s32 %s323, %s324
          %s326 = smul.addr %s325, 8
          %s327 = scalar_lea.vmem %s1, %s326
          %s328 = smul.u32 2, %s24
        $region48: #{tpu_custom_call.1} parent=39 // pred_fallthru
          _
      $region40: #{tpu_custom_call.1} parent=5 // pred_fallthru
        _
      %p329 = scmp.le.s32.totalorder 1, %s16
      %p330 = scmp.lt.s32.totalorder %s16, 5
      %p331 = pnand %p329, %p330
      %p332 = pneg %p331
      // Predicated region
      $region49: #{tpu_custom_call.1} parent=5 // pred_check
        _
      $region50: #{tpu_custom_call.1} parent=5 // pred_check_branch
        %334 = sbr.rel (%p331) target = $region52
      $region51: #{tpu_custom_call.1} parent=5 // pred_region
        %s335 = ssub.s32 %s16, 1
        %s336 = smul.u32 2, %s26
        %p337 = scmp.lt.s32.totalorder %s25, 1
        %s338 = scalar_select %p337, %s25, 1
        %p339 = scmp.lt.s32.totalorder %s336, 3
        %s340 = scalar_select %p339, %s336, 3
        %s341 = smul.addr %s338, 4
        %s342 = sadd.s32 %s340, %s341
        %s343 = smul.addr %s342, 8
        %s344 = scalar_lea.vmem %s0, %s343
        %p345 = pneg %p56
        %p346 = pneg %p53
        %s347 = smul.u32 2, %s26
        %p348 = scmp.lt.s32.totalorder %s25, 1
        %s349 = scalar_select %p348, %s25, 1
        %p350 = scmp.lt.s32.totalorder %s347, 3
        %s351 = scalar_select %p350, %s347, 3
        %s352 = smul.addr %s349, 4
        %s353 = sadd.s32 %s351, %s352
        %s354 = smul.addr %s353, 8
        %s355 = scalar_lea.vmem %s1, %s354
        %p356 = pneg %p84
        %p357 = pneg %p81
        %p358 = pneg %p105
        %p359 = pneg %p102
        %p360 = pneg %p126
        %p361 = pneg %p123
        %p362 = pneg %p147
        %p363 = pneg %p144
        %p364 = pneg %p168
        %p365 = pneg %p165
        %p366 = pneg %p189
        %p367 = pneg %p186
        %p368 = pneg %p210
        %p369 = pneg %p207
        %p370 = pneg %p238
        %p371 = pneg %p235
        %s372 = sand.u32 %s225, 1
        %s373 = sand.u32 %s225, 1
        %s374 = smul.addr %s373, 32
        %s375 = scalar_lea.vmem [#allocation2], %s374
        %p376 = pneg %p266
        %p377 = pneg %p263
        %s378 = sand.u32 %s253, 1
        %s379 = sand.u32 %s253, 1
        %s380 = smul.addr %s379, 32
        %s381 = scalar_lea.vmem [#allocation3], %s380
        %s382 = smul.u32 2, %s26
        %p383 = scmp.lt.s32.totalorder %s25, 1
        %s384 = scalar_select %p383, %s25, 1
        %p385 = scmp.lt.s32.totalorder %s382, 3
        %s386 = scalar_select %p385, %s382, 3
        %s387 = smul.addr %s384, 4
        %s388 = sadd.s32 %s386, %s387
        %s389 = smul.addr %s388, 8
        %s390 = scalar_lea.vmem %s0, %s389
        %s391 = smul.u32 2, %s26
        %s392 = smul.u32 2, %s26
        %p393 = scmp.lt.s32.totalorder %s25, 1
        %s394 = scalar_select %p393, %s25, 1
        %p395 = scmp.lt.s32.totalorder %s392, 3
        %s396 = scalar_select %p395, %s392, 3
        %s397 = smul.addr %s394, 4
        %s398 = sadd.s32 %s396, %s397
        %s399 = smul.addr %s398, 8
        %s400 = scalar_lea.vmem %s1, %s399
        %s401 = smul.u32 2, %s26
        %s402 = smul.u32 2, %s26
        %s403 = smul.u32 2, %s26
        %v405 = vld [vmem:[%s390] sm:$0xff]
        %v406 = vld [vmem:[%s390 + $0x8] sm:$0xff]
        %v407 = vld [vmem:[%s2] sm:$0x1]
        %v408 = vld [vmem:[%s3] sm:$0x1]
        %vm409 = vcmask 261120
        %v410 = vsel %vm409, %v405, 0.0
        %411 = vadd.xlane.f32.xlu0 %v410
        %v412 = vpop.xlane.xlu0 %411
        %v413 = vsel %vm409, %v406, 0.0
        %414 = vadd.xlane.f32.xlu0 %v413
        %v415 = vpop.xlane.xlu0 %414
        %v416 = vrcp.pop 32.0
        %v417 = vmul.f32 %v412, %v416
        %v418 = vmul.f32 %v415, %v416
        %v419 = vsub.f32 %v405, %v417
        %v420 = vsub.f32 %v406, %v418
        %v421 = vmul.f32 %v419, %v419
        %v422 = vmul.f32 %v420, %v420
        %v423 = vsel %vm409, %v421, 0.0
        %424 = vadd.xlane.f32.xlu0 %v423
        %v425 = vpop.xlane.xlu0 %424
        %v426 = vsel %vm409, %v422, 0.0
        %427 = vadd.xlane.f32.xlu0 %v426
        %v428 = vpop.xlane.xlu0 %427
        %v429 = vmul.f32 %v425, %v416
        %v430 = vmul.f32 %v428, %v416
        %v431 = vadd.f32 %v429, 1e-05
        %v432 = vadd.f32 %v430, 1e-05
        %v433 = vrsqrt.pop %v431
        %v434 = vrsqrt.pop %v432
        %v435 = vmul.f32 %v419, %v433
        %v436 = vmul.f32 %v420, %v434
        %v438 = vlaneseq
        %v439 = vshrl.u32 %v438, 7
        %v440 = vsub.s32 0, %v439
        %v441 = vrot.slane %v407, %v440
        %v443 = vmul.f32 %v435, %v441
        %v444 = vmul.f32 %v436, %v441
        %v446 = vlaneseq
        %v447 = vshrl.u32 %v446, 7
        %v448 = vsub.s32 0, %v447
        %v449 = vrot.slane %v408, %v448
        %v451 = vadd.f32 %v443, %v449
        %v452 = vadd.f32 %v444, %v449
        %v453 = vld [vmem:[%s400] sm:$0xff]
        %v454 = vld [vmem:[%s400 + $0x8] sm:$0xff]
        %v455 = vsel %vm409, %v453, 0.0
        %456 = vadd.xlane.f32.xlu0 %v455
        %v457 = vpop.xlane.xlu0 %456
        %v458 = vsel %vm409, %v454, 0.0
        %459 = vadd.xlane.f32.xlu0 %v458
        %v460 = vpop.xlane.xlu0 %459
        %v461 = vmul.f32 %v457, %v416
        %v462 = vmul.f32 %v460, %v416
        %v463 = vsub.f32 %v453, %v461
        %v464 = vsub.f32 %v454, %v462
        %v465 = vmul.f32 %v463, %v463
        %v466 = vmul.f32 %v464, %v464
        %v467 = vsel %vm409, %v465, 0.0
        %468 = vadd.xlane.f32.xlu0 %v467
        %v469 = vpop.xlane.xlu0 %468
        %v470 = vsel %vm409, %v466, 0.0
        %471 = vadd.xlane.f32.xlu0 %v470
        %v472 = vpop.xlane.xlu0 %471
        %v473 = vmul.f32 %v469, %v416
        %v474 = vmul.f32 %v472, %v416
        %v475 = vadd.f32 %v473, 1e-05
        %v476 = vadd.f32 %v474, 1e-05
        %v477 = vrsqrt.pop %v475
        %v478 = vrsqrt.pop %v476
        %v479 = vmul.f32 %v463, %v477
        %v480 = vmul.f32 %v464, %v478
        %v481 = vmul.f32 %v479, %v441
        %v482 = vmul.f32 %v480, %v441
        %v483 = vadd.f32 %v481, %v449
        %v484 = vadd.f32 %v482, %v449
        %v485 = vpack.c.bf16 %v452, %v451
        %v486 = vpack.c.bf16 %v484, %v483
        %v487 = vld [vmem:[%s4] sm:$0xf]
        %v488 = vld [vmem:[%s4 + $0x4] sm:$0xf]
        %v489 = vld [vmem:[%s4 + $0x8] sm:$0xf]
        %v490 = vld [vmem:[%s4 + $0xc] sm:$0xf]
        %v491 = vld [vmem:[%s5] sm:$0x1]
        %v493 = vlaneseq
        %v494 = vshrl.u32 %v493, 7
        %v495 = vsub.s32 0, %v494
        %v496 = vrot.slane %v491, %v495
        %v502 = vunpack.c.l.b16 %v487
        %v503 = vunpack.c.l.b16 %v488
        %v504 = vunpack.c.l.b16 %v489
        %v505 = vunpack.c.l.b16 %v490
        %v506 = vpack.c.b16 %v503, %v502
        %v507 = vpack.c.b16 %v505, %v504
        %v511 = vsel %vm409, %v485, 0
        %513 = vmatprep.subr.bf16.mxu0 0
        %514 = vmatpush1.bf16.msra.mxu0 0
        %515 = vmatprep.subr.bf16.mxu0 0
        %516 = vmatpush1.bf16.msra.mxu0 0
        %517 = vmatprep.subr.bf16.mxu0 0
        %518 = vmatpush1.bf16.msra.mxu0 0
        %519 = vmatprep.subr.bf16.mxu0 0
        %520 = vmatpush1.bf16.msra.mxu0 0
        %521 = vmatprep.subr.bf16.mxu0 0
        %522 = vmatpush1.bf16.msra.mxu0 0
        %523 = vmatprep.subr.bf16.mxu0 0
        %524 = vmatpush1.bf16.msra.mxu0 0
        %525 = vmatprep.subr.bf16.mxu0 0
        %526 = vmatpush1.bf16.msra.mxu0 %v507
        %527 = vmatprep.subr.bf16.mxu0 0
        %528 = vmatpush1.bf16.msra.mxu0 %v506
        %529 = vmatprep.subr.bf16.mxu0 0
        %530 = vmatpush2.bf16.msra.mxu0 0
        %531 = vmatprep.subr.bf16.mxu0 0
        %532 = vmatpush2.bf16.msra.mxu0 0
        %533 = vmatprep.subr.bf16.mxu0 0
        %534 = vmatpush2.bf16.msra.mxu0 0
        %535 = vmatprep.subr.bf16.mxu0 0
        %536 = vmatpush2.bf16.msra.mxu0 0
        %537 = vmatprep.subr.bf16.mxu0 0
        %538 = vmatpush2.bf16.msra.mxu0 0
        %539 = vmatprep.subr.bf16.mxu0 0
        %540 = vmatpush2.bf16.msra.mxu0 0
        %541 = vmatprep.subr.bf16.mxu0 0
        %542 = vmatpush2.bf16.msra.mxu0 0
        %543 = vmatprep.subr.bf16.mxu0 0
        %544 = vmatpush2.bf16.msra.mxu0 0
        %545 = vmatprep.mubr.bf16.mxu0 0
        %546 = vmatmul.mubr.bf16.gmra.mxu0 %v511
        %v547 = vpop.f32.mrf.mxu0
        %v548 = vadd.f32 %v496, %v547
        %v549 = vpop.f32.mrf.mxu0
        %v550 = vpop.f32.mrf.mxu0
        %v551 = vadd.f32 %v496, %v550
        %v552 = vpop.f32.mrf.mxu0
        %553 = vdwg.mxu0
        %v554 = vpack.c.bf16 %v551, %v548
        %v556 = vunpack.c.l.b16 %v554
        %v557 = vunpack.c.h.b16 %v554
        %v558 = vpack.c.b16 %v556, %v556
        %v559 = vpack.c.b16 %v557, %v557
        %vm562 = vcmask 60416
        %563 = vst.msk [vmem:[%s375] sm:$0xf] %vm562, %v558
        %564 = vst.msk [vmem:[%s375 + $0x4] sm:$0xf] %vm562, %v559
        %v565 = vld [vmem:[%s6] sm:$0xf]
        %v566 = vld [vmem:[%s6 + $0x4] sm:$0xf]
        %v567 = vld [vmem:[%s6 + $0x8] sm:$0xf]
        %v568 = vld [vmem:[%s6 + $0xc] sm:$0xf]
        %v569 = vld [vmem:[%s7] sm:$0x1]
        %v571 = vlaneseq
        %v572 = vshrl.u32 %v571, 7
        %v573 = vsub.s32 0, %v572
        %v574 = vrot.slane %v569, %v573
        %v580 = vunpack.c.l.b16 %v565
        %v581 = vunpack.c.l.b16 %v566
        %v582 = vunpack.c.l.b16 %v567
        %v583 = vunpack.c.l.b16 %v568
        %v584 = vpack.c.b16 %v581, %v580
        %v585 = vpack.c.b16 %v583, %v582
        %v589 = vsel %vm409, %v486, 0
        %591 = vmatprep.subr.bf16.mxu0 0
        %592 = vmatpush1.bf16.msra.mxu0 0
        %593 = vmatprep.subr.bf16.mxu0 0
        %594 = vmatpush1.bf16.msra.mxu0 0
        %595 = vmatprep.subr.bf16.mxu0 0
        %596 = vmatpush1.bf16.msra.mxu0 0
        %597 = vmatprep.subr.bf16.mxu0 0
        %598 = vmatpush1.bf16.msra.mxu0 0
        %599 = vmatprep.subr.bf16.mxu0 0
        %600 = vmatpush1.bf16.msra.mxu0 0
        %601 = vmatprep.subr.bf16.mxu0 0
        %602 = vmatpush1.bf16.msra.mxu0 0
        %603 = vmatprep.subr.bf16.mxu0 0
        %604 = vmatpush1.bf16.msra.mxu0 %v585
        %605 = vmatprep.subr.bf16.mxu0 0
        %606 = vmatpush1.bf16.msra.mxu0 %v584
        %607 = vmatprep.subr.bf16.mxu0 0
        %608 = vmatpush2.bf16.msra.mxu0 0
        %609 = vmatprep.subr.bf16.mxu0 0
        %610 = vmatpush2.bf16.msra.mxu0 0
        %611 = vmatprep.subr.bf16.mxu0 0
        %612 = vmatpush2.bf16.msra.mxu0 0
        %613 = vmatprep.subr.bf16.mxu0 0
        %614 = vmatpush2.bf16.msra.mxu0 0
        %615 = vmatprep.subr.bf16.mxu0 0
        %616 = vmatpush2.bf16.msra.mxu0 0
        %617 = vmatprep.subr.bf16.mxu0 0
        %618 = vmatpush2.bf16.msra.mxu0 0
        %619 = vmatprep.subr.bf16.mxu0 0
        %620 = vmatpush2.bf16.msra.mxu0 0
        %621 = vmatprep.subr.bf16.mxu0 0
        %622 = vmatpush2.bf16.msra.mxu0 0
        %623 = vmatprep.mubr.bf16.mxu0 0
        %624 = vmatmul.mubr.bf16.gmra.mxu0 %v589
        %v625 = vpop.f32.mrf.mxu0
        %v626 = vadd.f32 %v574, %v625
        %v627 = vpop.f32.mrf.mxu0
        %v628 = vpop.f32.mrf.mxu0
        %v629 = vadd.f32 %v574, %v628
        %v630 = vpop.f32.mrf.mxu0
        %631 = vdwg.mxu0
        %v632 = vpack.c.bf16 %v629, %v626
        %v634 = vunpack.c.l.b16 %v632
        %v635 = vunpack.c.h.b16 %v632
        %v636 = vpack.c.b16 %v634, %v634
        %v637 = vpack.c.b16 %v635, %v635
        %640 = vst.msk [vmem:[%s381] sm:$0xf] %vm562, %v636
        %641 = vst.msk [vmem:[%s381 + $0x4] sm:$0xf] %vm562, %v637
        %s642 = scalar_lea.vmem %s4, 16
        %v643 = vld [vmem:[%s642] sm:$0xf]
        %v644 = vld [vmem:[%s642 + $0x4] sm:$0xf]
        %v645 = vld [vmem:[%s642 + $0x8] sm:$0xf]
        %v646 = vld [vmem:[%s642 + $0xc] sm:$0xf]
        %s647 = scalar_lea.vmem %s5, 1
        %v648 = vld [vmem:[%s647] sm:$0x1]
        %v650 = vlaneseq
        %v651 = vshrl.u32 %v650, 7
        %v652 = vsub.s32 0, %v651
        %v653 = vrot.slane %v648, %v652
        %v659 = vunpack.c.l.b16 %v643
        %v660 = vunpack.c.l.b16 %v644
        %v661 = vunpack.c.l.b16 %v645
        %v662 = vunpack.c.l.b16 %v646
        %v663 = vpack.c.b16 %v660, %v659
        %v664 = vpack.c.b16 %v662, %v661
        %667 = vmatprep.subr.bf16.mxu0 0
        %668 = vmatpush1.bf16.msra.mxu0 0
        %669 = vmatprep.subr.bf16.mxu0 0
        %670 = vmatpush1.bf16.msra.mxu0 0
        %671 = vmatprep.subr.bf16.mxu0 0
        %672 = vmatpush1.bf16.msra.mxu0 0
        %673 = vmatprep.subr.bf16.mxu0 0
        %674 = vmatpush1.bf16.msra.mxu0 0
        %675 = vmatprep.subr.bf16.mxu0 0
        %676 = vmatpush1.bf16.msra.mxu0 0
        %677 = vmatprep.subr.bf16.mxu0 0
        %678 = vmatpush1.bf16.msra.mxu0 0
        %679 = vmatprep.subr.bf16.mxu0 0
        %680 = vmatpush1.bf16.msra.mxu0 %v664
        %681 = vmatprep.subr.bf16.mxu0 0
        %682 = vmatpush1.bf16.msra.mxu0 %v663
        %683 = vmatprep.subr.bf16.mxu0 0
        %684 = vmatpush2.bf16.msra.mxu0 0
        %685 = vmatprep.subr.bf16.mxu0 0
        %686 = vmatpush2.bf16.msra.mxu0 0
        %687 = vmatprep.subr.bf16.mxu0 0
        %688 = vmatpush2.bf16.msra.mxu0 0
        %689 = vmatprep.subr.bf16.mxu0 0
        %690 = vmatpush2.bf16.msra.mxu0 0
        %691 = vmatprep.subr.bf16.mxu0 0
        %692 = vmatpush2.bf16.msra.mxu0 0
        %693 = vmatprep.subr.bf16.mxu0 0
        %694 = vmatpush2.bf16.msra.mxu0 0
        %695 = vmatprep.subr.bf16.mxu0 0
        %696 = vmatpush2.bf16.msra.mxu0 0
        %697 = vmatprep.subr.bf16.mxu0 0
        %698 = vmatpush2.bf16.msra.mxu0 0
        %699 = vmatprep.mubr.bf16.mxu0 0
        %700 = vmatmul.mubr.bf16.gmra.mxu0 %v511
        %v701 = vpop.f32.mrf.mxu0
        %v702 = vadd.f32 %v653, %v701
        %v703 = vpop.f32.mrf.mxu0
        %v704 = vpop.f32.mrf.mxu0
        %v705 = vadd.f32 %v653, %v704
        %v706 = vpop.f32.mrf.mxu0
        %707 = vdwg.mxu0
        %v708 = vpack.c.bf16 %v705, %v702
        %v710 = vunpack.c.l.b16 %v708
        %v711 = vunpack.c.h.b16 %v708
        %v712 = vpack.c.b16 %v710, %v710
        %v713 = vpack.c.b16 %v711, %v711
        %s716 = scalar_lea.vmem %s375, 8 [#allocation2]
        %717 = vst.msk [vmem:[%s716] sm:$0xf] %vm562, %v712
        %718 = vst.msk [vmem:[%s716 + $0x4] sm:$0xf] %vm562, %v713
        %s719 = scalar_lea.vmem %s6, 16
        %v720 = vld [vmem:[%s719] sm:$0xf]
        %v721 = vld [vmem:[%s719 + $0x4] sm:$0xf]
        %v722 = vld [vmem:[%s719 + $0x8] sm:$0xf]
        %v723 = vld [vmem:[%s719 + $0xc] sm:$0xf]
        %s724 = scalar_lea.vmem %s7, 1
        %v725 = vld [vmem:[%s724] sm:$0x1]
        %v727 = vlaneseq
        %v728 = vshrl.u32 %v727, 7
        %v729 = vsub.s32 0, %v728
        %v730 = vrot.slane %v725, %v729
        %v736 = vunpack.c.l.b16 %v720
        %v737 = vunpack.c.l.b16 %v721
        %v738 = vunpack.c.l.b16 %v722
        %v739 = vunpack.c.l.b16 %v723
        %v740 = vpack.c.b16 %v737, %v736
        %v741 = vpack.c.b16 %v739, %v738
        %744 = vmatprep.subr.bf16.mxu0 0
        %745 = vmatpush1.bf16.msra.mxu0 0
        %746 = vmatprep.subr.bf16.mxu0 0
        %747 = vmatpush1.bf16.msra.mxu0 0
        %748 = vmatprep.subr.bf16.mxu0 0
        %749 = vmatpush1.bf16.msra.mxu0 0
        %750 = vmatprep.subr.bf16.mxu0 0
        %751 = vmatpush1.bf16.msra.mxu0 0
        %752 = vmatprep.subr.bf16.mxu0 0
        %753 = vmatpush1.bf16.msra.mxu0 0
        %754 = vmatprep.subr.bf16.mxu0 0
        %755 = vmatpush1.bf16.msra.mxu0 0
        %756 = vmatprep.subr.bf16.mxu0 0
        %757 = vmatpush1.bf16.msra.mxu0 %v741
        %758 = vmatprep.subr.bf16.mxu0 0
        %759 = vmatpush1.bf16.msra.mxu0 %v740
        %760 = vmatprep.subr.bf16.mxu0 0
        %761 = vmatpush2.bf16.msra.mxu0 0
        %762 = vmatprep.subr.bf16.mxu0 0
        %763 = vmatpush2.bf16.msra.mxu0 0
        %764 = vmatprep.subr.bf16.mxu0 0
        %765 = vmatpush2.bf16.msra.mxu0 0
        %766 = vmatprep.subr.bf16.mxu0 0
        %767 = vmatpush2.bf16.msra.mxu0 0
        %768 = vmatprep.subr.bf16.mxu0 0
        %769 = vmatpush2.bf16.msra.mxu0 0
        %770 = vmatprep.subr.bf16.mxu0 0
        %771 = vmatpush2.bf16.msra.mxu0 0
        %772 = vmatprep.subr.bf16.mxu0 0
        %773 = vmatpush2.bf16.msra.mxu0 0
        %774 = vmatprep.subr.bf16.mxu0 0
        %775 = vmatpush2.bf16.msra.mxu0 0
        %776 = vmatprep.mubr.bf16.mxu0 0
        %777 = vmatmul.mubr.bf16.gmra.mxu0 %v589
        %v778 = vpop.f32.mrf.mxu0
        %v779 = vadd.f32 %v730, %v778
        %v780 = vpop.f32.mrf.mxu0
        %v781 = vpop.f32.mrf.mxu0
        %v782 = vadd.f32 %v730, %v781
        %v783 = vpop.f32.mrf.mxu0
        %784 = vdwg.mxu0
        %v785 = vpack.c.bf16 %v782, %v779
        %v787 = vunpack.c.l.b16 %v785
        %v788 = vunpack.c.h.b16 %v785
        %v789 = vpack.c.b16 %v787, %v787
        %v790 = vpack.c.b16 %v788, %v788
        %s793 = scalar_lea.vmem %s381, 8 [#allocation3]
        %794 = vst.msk [vmem:[%s793] sm:$0xf] %vm562, %v789
        %795 = vst.msk [vmem:[%s793 + $0x4] sm:$0xf] %vm562, %v790
        %s796 = scalar_lea.vmem %s4, 32
        %v797 = vld [vmem:[%s796] sm:$0xf]
        %v798 = vld [vmem:[%s796 + $0x4] sm:$0xf]
        %v799 = vld [vmem:[%s796 + $0x8] sm:$0xf]
        %v800 = vld [vmem:[%s796 + $0xc] sm:$0xf]
        %s801 = scalar_lea.vmem %s5, 2
        %v802 = vld [vmem:[%s801] sm:$0x1]
        %v804 = vlaneseq
        %v805 = vshrl.u32 %v804, 7
        %v806 = vsub.s32 0, %v805
        %v807 = vrot.slane %v802, %v806
        %v813 = vunpack.c.l.b16 %v797
        %v814 = vunpack.c.l.b16 %v798
        %v815 = vunpack.c.l.b16 %v799
        %v816 = vunpack.c.l.b16 %v800
        %v817 = vpack.c.b16 %v814, %v813
        %v818 = vpack.c.b16 %v816, %v815
        %821 = vmatprep.subr.bf16.mxu0 0
        %822 = vmatpush1.bf16.msra.mxu0 0
        %823 = vmatprep.subr.bf16.mxu0 0
        %824 = vmatpush1.bf16.msra.mxu0 0
        %825 = vmatprep.subr.bf16.mxu0 0
        %826 = vmatpush1.bf16.msra.mxu0 0
        %827 = vmatprep.subr.bf16.mxu0 0
        %828 = vmatpush1.bf16.msra.mxu0 0
        %829 = vmatprep.subr.bf16.mxu0 0
        %830 = vmatpush1.bf16.msra.mxu0 0
        %831 = vmatprep.subr.bf16.mxu0 0
        %832 = vmatpush1.bf16.msra.mxu0 0
        %833 = vmatprep.subr.bf16.mxu0 0
        %834 = vmatpush1.bf16.msra.mxu0 %v818
        %835 = vmatprep.subr.bf16.mxu0 0
        %836 = vmatpush1.bf16.msra.mxu0 %v817
        %837 = vmatprep.subr.bf16.mxu0 0
        %838 = vmatpush2.bf16.msra.mxu0 0
        %839 = vmatprep.subr.bf16.mxu0 0
        %840 = vmatpush2.bf16.msra.mxu0 0
        %841 = vmatprep.subr.bf16.mxu0 0
        %842 = vmatpush2.bf16.msra.mxu0 0
        %843 = vmatprep.subr.bf16.mxu0 0
        %844 = vmatpush2.bf16.msra.mxu0 0
        %845 = vmatprep.subr.bf16.mxu0 0
        %846 = vmatpush2.bf16.msra.mxu0 0
        %847 = vmatprep.subr.bf16.mxu0 0
        %848 = vmatpush2.bf16.msra.mxu0 0
        %849 = vmatprep.subr.bf16.mxu0 0
        %850 = vmatpush2.bf16.msra.mxu0 0
        %851 = vmatprep.subr.bf16.mxu0 0
        %852 = vmatpush2.bf16.msra.mxu0 0
        %853 = vmatprep.mubr.bf16.mxu0 0
        %854 = vmatmul.mubr.bf16.gmra.mxu0 %v511
        %v855 = vpop.f32.mrf.mxu0
        %v856 = vadd.f32 %v807, %v855
        %v857 = vpop.f32.mrf.mxu0
        %v858 = vpop.f32.mrf.mxu0
        %v859 = vadd.f32 %v807, %v858
        %v860 = vpop.f32.mrf.mxu0
        %861 = vdwg.mxu0
        %v862 = vpack.c.bf16 %v859, %v856
        %v864 = vunpack.c.l.b16 %v862
        %v865 = vunpack.c.h.b16 %v862
        %v866 = vpack.c.b16 %v864, %v864
        %v867 = vpack.c.b16 %v865, %v865
        %s870 = scalar_lea.vmem %s375, 16 [#allocation2]
        %871 = vst.msk [vmem:[%s870] sm:$0xf] %vm562, %v866
        %872 = vst.msk [vmem:[%s870 + $0x4] sm:$0xf] %vm562, %v867
        %s873 = scalar_lea.vmem %s6, 32
        %v874 = vld [vmem:[%s873] sm:$0xf]
        %v875 = vld [vmem:[%s873 + $0x4] sm:$0xf]
        %v876 = vld [vmem:[%s873 + $0x8] sm:$0xf]
        %v877 = vld [vmem:[%s873 + $0xc] sm:$0xf]
        %s878 = scalar_lea.vmem %s7, 2
        %v879 = vld [vmem:[%s878] sm:$0x1]
        %v881 = vlaneseq
        %v882 = vshrl.u32 %v881, 7
        %v883 = vsub.s32 0, %v882
        %v884 = vrot.slane %v879, %v883
        %v890 = vunpack.c.l.b16 %v874
        %v891 = vunpack.c.l.b16 %v875
        %v892 = vunpack.c.l.b16 %v876
        %v893 = vunpack.c.l.b16 %v877
        %v894 = vpack.c.b16 %v891, %v890
        %v895 = vpack.c.b16 %v893, %v892
        %898 = vmatprep.subr.bf16.mxu0 0
        %899 = vmatpush1.bf16.msra.mxu0 0
        %900 = vmatprep.subr.bf16.mxu0 0
        %901 = vmatpush1.bf16.msra.mxu0 0
        %902 = vmatprep.subr.bf16.mxu0 0
        %903 = vmatpush1.bf16.msra.mxu0 0
        %904 = vmatprep.subr.bf16.mxu0 0
        %905 = vmatpush1.bf16.msra.mxu0 0
        %906 = vmatprep.subr.bf16.mxu0 0
        %907 = vmatpush1.bf16.msra.mxu0 0
        %908 = vmatprep.subr.bf16.mxu0 0
        %909 = vmatpush1.bf16.msra.mxu0 0
        %910 = vmatprep.subr.bf16.mxu0 0
        %911 = vmatpush1.bf16.msra.mxu0 %v895
        %912 = vmatprep.subr.bf16.mxu0 0
        %913 = vmatpush1.bf16.msra.mxu0 %v894
        %914 = vmatprep.subr.bf16.mxu0 0
        %915 = vmatpush2.bf16.msra.mxu0 0
        %916 = vmatprep.subr.bf16.mxu0 0
        %917 = vmatpush2.bf16.msra.mxu0 0
        %918 = vmatprep.subr.bf16.mxu0 0
        %919 = vmatpush2.bf16.msra.mxu0 0
        %920 = vmatprep.subr.bf16.mxu0 0
        %921 = vmatpush2.bf16.msra.mxu0 0
        %922 = vmatprep.subr.bf16.mxu0 0
        %923 = vmatpush2.bf16.msra.mxu0 0
        %924 = vmatprep.subr.bf16.mxu0 0
        %925 = vmatpush2.bf16.msra.mxu0 0
        %926 = vmatprep.subr.bf16.mxu0 0
        %927 = vmatpush2.bf16.msra.mxu0 0
        %928 = vmatprep.subr.bf16.mxu0 0
        %929 = vmatpush2.bf16.msra.mxu0 0
        %930 = vmatprep.mubr.bf16.mxu0 0
        %931 = vmatmul.mubr.bf16.gmra.mxu0 %v589
        %v932 = vpop.f32.mrf.mxu0
        %v933 = vadd.f32 %v884, %v932
        %v934 = vpop.f32.mrf.mxu0
        %v935 = vpop.f32.mrf.mxu0
        %v936 = vadd.f32 %v884, %v935
        %v937 = vpop.f32.mrf.mxu0
        %938 = vdwg.mxu0
        %v939 = vpack.c.bf16 %v936, %v933
        %v941 = vunpack.c.l.b16 %v939
        %v942 = vunpack.c.h.b16 %v939
        %v943 = vpack.c.b16 %v941, %v941
        %v944 = vpack.c.b16 %v942, %v942
        %s947 = scalar_lea.vmem %s381, 16 [#allocation3]
        %948 = vst.msk [vmem:[%s947] sm:$0xf] %vm562, %v943
        %949 = vst.msk [vmem:[%s947 + $0x4] sm:$0xf] %vm562, %v944
        %s950 = scalar_lea.vmem %s4, 48
        %v951 = vld [vmem:[%s950] sm:$0xf]
        %v952 = vld [vmem:[%s950 + $0x4] sm:$0xf]
        %v953 = vld [vmem:[%s950 + $0x8] sm:$0xf]
        %v954 = vld [vmem:[%s950 + $0xc] sm:$0xf]
        %s955 = scalar_lea.vmem %s5, 3
        %v956 = vld [vmem:[%s955] sm:$0x1]
        %v958 = vlaneseq
        %v959 = vshrl.u32 %v958, 7
        %v960 = vsub.s32 0, %v959
        %v961 = vrot.slane %v956, %v960
        %v967 = vunpack.c.l.b16 %v951
        %v968 = vunpack.c.l.b16 %v952
        %v969 = vunpack.c.l.b16 %v953
        %v970 = vunpack.c.l.b16 %v954
        %v971 = vpack.c.b16 %v968, %v967
        %v972 = vpack.c.b16 %v970, %v969
        %975 = vmatprep.subr.bf16.mxu0 0
        %976 = vmatpush1.bf16.msra.mxu0 0
        %977 = vmatprep.subr.bf16.mxu0 0
        %978 = vmatpush1.bf16.msra.mxu0 0
        %979 = vmatprep.subr.bf16.mxu0 0
        %980 = vmatpush1.bf16.msra.mxu0 0
        %981 = vmatprep.subr.bf16.mxu0 0
        %982 = vmatpush1.bf16.msra.mxu0 0
        %983 = vmatprep.subr.bf16.mxu0 0
        %984 = vmatpush1.bf16.msra.mxu0 0
        %985 = vmatprep.subr.bf16.mxu0 0
        %986 = vmatpush1.bf16.msra.mxu0 0
        %987 = vmatprep.subr.bf16.mxu0 0
        %988 = vmatpush1.bf16.msra.mxu0 %v972
        %989 = vmatprep.subr.bf16.mxu0 0
        %990 = vmatpush1.bf16.msra.mxu0 %v971
        %991 = vmatprep.subr.bf16.mxu0 0
        %992 = vmatpush2.bf16.msra.mxu0 0
        %993 = vmatprep.subr.bf16.mxu0 0
        %994 = vmatpush2.bf16.msra.mxu0 0
        %995 = vmatprep.subr.bf16.mxu0 0
        %996 = vmatpush2.bf16.msra.mxu0 0
        %997 = vmatprep.subr.bf16.mxu0 0
        %998 = vmatpush2.bf16.msra.mxu0 0
        %999 = vmatprep.subr.bf16.mxu0 0
        %1000 = vmatpush2.bf16.msra.mxu0 0
        %1001 = vmatprep.subr.bf16.mxu0 0
        %1002 = vmatpush2.bf16.msra.mxu0 0
        %1003 = vmatprep.subr.bf16.mxu0 0
        %1004 = vmatpush2.bf16.msra.mxu0 0
        %1005 = vmatprep.subr.bf16.mxu0 0
        %1006 = vmatpush2.bf16.msra.mxu0 0
        %1007 = vmatprep.mubr.bf16.mxu0 0
        %1008 = vmatmul.mubr.bf16.gmra.mxu0 %v511
        %v1009 = vpop.f32.mrf.mxu0
        %v1010 = vadd.f32 %v961, %v1009
        %v1011 = vpop.f32.mrf.mxu0
        %v1012 = vpop.f32.mrf.mxu0
        %v1013 = vadd.f32 %v961, %v1012
        %v1014 = vpop.f32.mrf.mxu0
        %1015 = vdwg.mxu0
        %v1016 = vpack.c.bf16 %v1013, %v1010
        %v1018 = vunpack.c.l.b16 %v1016
        %v1019 = vunpack.c.h.b16 %v1016
        %v1020 = vpack.c.b16 %v1018, %v1018
        %v1021 = vpack.c.b16 %v1019, %v1019
        %s1024 = scalar_lea.vmem %s375, 24 [#allocation2]
        %1025 = vst.msk [vmem:[%s1024] sm:$0xf] %vm562, %v1020
        %1026 = vst.msk [vmem:[%s1024 + $0x4] sm:$0xf] %vm562, %v1021
        %s1027 = scalar_lea.vmem %s6, 48
        %v1028 = vld [vmem:[%s1027] sm:$0xf]
        %v1029 = vld [vmem:[%s1027 + $0x4] sm:$0xf]
        %v1030 = vld [vmem:[%s1027 + $0x8] sm:$0xf]
        %v1031 = vld [vmem:[%s1027 + $0xc] sm:$0xf]
        %s1032 = scalar_lea.vmem %s7, 3
        %v1033 = vld [vmem:[%s1032] sm:$0x1]
        %v1035 = vlaneseq
        %v1036 = vshrl.u32 %v1035, 7
        %v1037 = vsub.s32 0, %v1036
        %v1038 = vrot.slane %v1033, %v1037
        %v1044 = vunpack.c.l.b16 %v1028
        %v1045 = vunpack.c.l.b16 %v1029
        %v1046 = vunpack.c.l.b16 %v1030
        %v1047 = vunpack.c.l.b16 %v1031
        %v1048 = vpack.c.b16 %v1045, %v1044
        %v1049 = vpack.c.b16 %v1047, %v1046
        %1052 = vmatprep.subr.bf16.mxu0 0
        %1053 = vmatpush1.bf16.msra.mxu0 0
        %1054 = vmatprep.subr.bf16.mxu0 0
        %1055 = vmatpush1.bf16.msra.mxu0 0
        %1056 = vmatprep.subr.bf16.mxu0 0
        %1057 = vmatpush1.bf16.msra.mxu0 0
        %1058 = vmatprep.subr.bf16.mxu0 0
        %1059 = vmatpush1.bf16.msra.mxu0 0
        %1060 = vmatprep.subr.bf16.mxu0 0
        %1061 = vmatpush1.bf16.msra.mxu0 0
        %1062 = vmatprep.subr.bf16.mxu0 0
        %1063 = vmatpush1.bf16.msra.mxu0 0
        %1064 = vmatprep.subr.bf16.mxu0 0
        %1065 = vmatpush1.bf16.msra.mxu0 %v1049
        %1066 = vmatprep.subr.bf16.mxu0 0
        %1067 = vmatpush1.bf16.msra.mxu0 %v1048
        %1068 = vmatprep.subr.bf16.mxu0 0
        %1069 = vmatpush2.bf16.msra.mxu0 0
        %1070 = vmatprep.subr.bf16.mxu0 0
        %1071 = vmatpush2.bf16.msra.mxu0 0
        %1072 = vmatprep.subr.bf16.mxu0 0
        %1073 = vmatpush2.bf16.msra.mxu0 0
        %1074 = vmatprep.subr.bf16.mxu0 0
        %1075 = vmatpush2.bf16.msra.mxu0 0
        %1076 = vmatprep.subr.bf16.mxu0 0
        %1077 = vmatpush2.bf16.msra.mxu0 0
        %1078 = vmatprep.subr.bf16.mxu0 0
        %1079 = vmatpush2.bf16.msra.mxu0 0
        %1080 = vmatprep.subr.bf16.mxu0 0
        %1081 = vmatpush2.bf16.msra.mxu0 0
        %1082 = vmatprep.subr.bf16.mxu0 0
        %1083 = vmatpush2.bf16.msra.mxu0 0
        %1084 = vmatprep.mubr.bf16.mxu0 0
        %1085 = vmatmul.mubr.bf16.gmra.mxu0 %v589
        %v1086 = vpop.f32.mrf.mxu0
        %v1087 = vadd.f32 %v1038, %v1086
        %v1088 = vpop.f32.mrf.mxu0
        %v1089 = vpop.f32.mrf.mxu0
        %v1090 = vadd.f32 %v1038, %v1089
        %v1091 = vpop.f32.mrf.mxu0
        %1092 = vdwg.mxu0
        %v1093 = vpack.c.bf16 %v1090, %v1087
        %v1095 = vunpack.c.l.b16 %v1093
        %v1096 = vunpack.c.h.b16 %v1093
        %v1097 = vpack.c.b16 %v1095, %v1095
        %v1098 = vpack.c.b16 %v1096, %v1096
        %s1101 = scalar_lea.vmem %s381, 24 [#allocation3]
        %1102 = vst.msk [vmem:[%s1101] sm:$0xf] %vm562, %v1097
        %1103 = vst.msk [vmem:[%s1101 + $0x4] sm:$0xf] %vm562, %v1098
        %s1104 = sand.u32 %s225, 1
        %s1105 = sand.u32 %s225, 1
        %s1106 = smul.addr %s1105, 32
        %s1107 = scalar_lea.vmem [#allocation2], %s1106
        %s1108 = sand.u32 %s253, 1
        %s1109 = sand.u32 %s253, 1
        %s1110 = smul.addr %s1109, 32
        %s1111 = scalar_lea.vmem [#allocation3], %s1110
        // Predicated region
        $region53: #{tpu_custom_call.1} parent=51 // pred_check
          %p1112 = pneg %p235
        $region54: #{tpu_custom_call.1} parent=51 // pred_check_branch
          %1114 = sbr.rel (%p1112) target = $region56
        $region55: #{tpu_custom_call.1} parent=51 // pred_region
          %s1115 = smul.u32 2, %s26
          %s1116 = smul.addr %s25, 16
          %s1117 = sadd.s32 %s1115, %s1116
          %s1118 = smul.addr %s1117, 4
          %s1119 = scalar_lea.vmem %s8, %s1118
          // Predicated region
          $region57: #{tpu_custom_call.1} parent=55 // pred_check
            _
          $region58: #{tpu_custom_call.1} parent=55 // pred_check_branch
            %1121 = sbr.rel (0) target = $region60
          $region59: #{tpu_custom_call.1} parent=55 // pred_region
            // Predicated region
            $region61: #{tpu_custom_call.1} parent=59 // pred_check
              _
            $region62: #{tpu_custom_call.1} parent=59 // pred_check_branch
              %1123 = sbr.rel target = $region64
            $region63: #{tpu_custom_call.1} parent=59 // pred_region
              // Predicated region
              $region76: #{tpu_custom_call.1} parent=63 // pred_check
                _
              $region77: #{tpu_custom_call.1} parent=63 // pred_check_branch
                %1153 = sbr.rel (0) target = $region79
              $region78: #{tpu_custom_call.1} parent=63 // pred_region
                loop: start=0, step=1, limit=1
                $region80: #{tpu_custom_call.1} parent=78 // loop_pre_header
                  _
                $region81: #{tpu_custom_call.1} parent=78 // loop_header
                  %s1155 = sphi 0, %s1159
                  %p1156 = scmp.ge.s32.totalorder %s1155, 1
                  %s1160 = sphi %s1107, %s1107
                  %s1161 = sphi %s1119, %s1119
                $region82: #{tpu_custom_call.1} parent=78 // loop_header_branch
                  %1158 = sbr.rel (%p1156) target = $region86
                $region83: #{tpu_custom_call.1} parent=78 // loop_body
                  _
                $region84: #{tpu_custom_call.1} parent=78 // loop_footer
                  %s1159 = sadd.s32 1, %s1155
                $region85: #{tpu_custom_call.1} parent=78 // loop_footer_branch
                  %1154 = sbr.rel target = $region81
                $region86: #{tpu_custom_call.1} parent=78 // loop_exit
                  _
                %s1163 = ssub.s32 16, 1
                loop: start=0, step=1, limit=1
                $region87: #{tpu_custom_call.1} parent=78 // loop_pre_header
                  _
                $region88: #{tpu_custom_call.1} parent=78 // loop_header
                  %s1165 = sphi 0, %s1169
                  %p1166 = scmp.ge.s32.totalorder %s1165, 1
                  %s1170 = sphi %s1107, %s1107
                  %s1171 = sphi %s1119, %s1119
                $region89: #{tpu_custom_call.1} parent=78 // loop_header_branch
                  %1168 = sbr.rel (%p1166) target = $region93
                $region90: #{tpu_custom_call.1} parent=78 // loop_body
                  %v1172 = vld [vmem:[%s1170] sm:%s1163]
                  %1173 = vst [vmem:[%s1171] sm:%s1163] %v1172
                  %v1174 = vld [vmem:[%s1170 + $0x4] sm:%s1163]
                  %1175 = vst [vmem:[%s1171 + $0x4] sm:%s1163] %v1174
                  %v1176 = vld [vmem:[%s1170 + $0x8] sm:%s1163]
                  %1177 = vst [vmem:[%s1171 + $0x10] sm:%s1163] %v1176
                  %v1178 = vld [vmem:[%s1170 + $0xc] sm:%s1163]
                  %1179 = vst [vmem:[%s1171 + $0x14] sm:%s1163] %v1178
                  %v1180 = vld [vmem:[%s1170 + $0x10] sm:%s1163]
                  %1181 = vst [vmem:[%s1171 + $0x20] sm:%s1163] %v1180
                  %v1182 = vld [vmem:[%s1170 + $0x14] sm:%s1163]
                  %1183 = vst [vmem:[%s1171 + $0x24] sm:%s1163] %v1182
                  %v1184 = vld [vmem:[%s1170 + $0x18] sm:%s1163]
                  %1185 = vst [vmem:[%s1171 + $0x30] sm:%s1163] %v1184
                  %v1186 = vld [vmem:[%s1170 + $0x1c] sm:%s1163]
                  %1187 = vst [vmem:[%s1171 + $0x34] sm:%s1163] %v1186
                $region91: #{tpu_custom_call.1} parent=78 // loop_footer
                  %s1169 = sadd.s32 1, %s1165
                $region92: #{tpu_custom_call.1} parent=78 // loop_footer_branch
                  %1164 = sbr.rel target = $region88
                $region93: #{tpu_custom_call.1} parent=78 // loop_exit
                  _
              $region79: #{tpu_custom_call.1} parent=63 // pred_fallthru
                _
            $region64: #{tpu_custom_call.1} parent=59 // pred_fallthru
              _
            // Predicated region
            $region65: #{tpu_custom_call.1} parent=59 // pred_check
              _
            $region66: #{tpu_custom_call.1} parent=59 // pred_check_branch
              %1125 = sbr.rel (0) target = $region68
            $region67: #{tpu_custom_call.1} parent=59 // pred_region
              %s1127 = ssub.s32 16, 1
              loop: start=0, step=1, limit=1
              $region69: #{tpu_custom_call.1} parent=67 // loop_pre_header
                _
              $region70: #{tpu_custom_call.1} parent=67 // loop_header
                %s1129 = sphi 0, %s1133
                %p1130 = scmp.ge.s32.totalorder %s1129, 1
                %s1134 = sphi %s1107, %s1107
                %s1135 = sphi %s1119, %s1119
              $region71: #{tpu_custom_call.1} parent=67 // loop_header_branch
                %1132 = sbr.rel (%p1130) target = $region75
              $region72: #{tpu_custom_call.1} parent=67 // loop_body
                %v1136 = vld [vmem:[%s1134] sm:%s1127]
                %1137 = vst [vmem:[%s1135] sm:%s1127] %v1136
                %v1138 = vld [vmem:[%s1134 + $0x4] sm:%s1127]
                %1139 = vst [vmem:[%s1135 + $0x4] sm:%s1127] %v1138
                %v1140 = vld [vmem:[%s1134 + $0x8] sm:%s1127]
                %1141 = vst [vmem:[%s1135 + $0x10] sm:%s1127] %v1140
                %v1142 = vld [vmem:[%s1134 + $0xc] sm:%s1127]
                %1143 = vst [vmem:[%s1135 + $0x14] sm:%s1127] %v1142
                %v1144 = vld [vmem:[%s1134 + $0x10] sm:%s1127]
                %1145 = vst [vmem:[%s1135 + $0x20] sm:%s1127] %v1144
                %v1146 = vld [vmem:[%s1134 + $0x14] sm:%s1127]
                %1147 = vst [vmem:[%s1135 + $0x24] sm:%s1127] %v1146
                %v1148 = vld [vmem:[%s1134 + $0x18] sm:%s1127]
                %1149 = vst [vmem:[%s1135 + $0x30] sm:%s1127] %v1148
                %v1150 = vld [vmem:[%s1134 + $0x1c] sm:%s1127]
                %1151 = vst [vmem:[%s1135 + $0x34] sm:%s1127] %v1150
              $region73: #{tpu_custom_call.1} parent=67 // loop_footer
                %s1133 = sadd.s32 1, %s1129
              $region74: #{tpu_custom_call.1} parent=67 // loop_footer_branch
                %1128 = sbr.rel target = $region70
              $region75: #{tpu_custom_call.1} parent=67 // loop_exit
                _
            $region68: #{tpu_custom_call.1} parent=59 // pred_fallthru
              _
          $region60: #{tpu_custom_call.1} parent=55 // pred_fallthru
            _
          %1188 = vnop
        $region56: #{tpu_custom_call.1} parent=51 // pred_fallthru
          _
        // Predicated region
        $region94: #{tpu_custom_call.1} parent=51 // pred_check
          %p1189 = pneg %p263
        $region95: #{tpu_custom_call.1} parent=51 // pred_check_branch
          %1191 = sbr.rel (%p1189) target = $region97
        $region96: #{tpu_custom_call.1} parent=51 // pred_region
          %s1192 = smul.u32 2, %s26
          %s1193 = smul.addr %s25, 16
          %s1194 = sadd.s32 %s1192, %s1193
          %s1195 = smul.addr %s1194, 4
          %s1196 = scalar_lea.vmem %s9, %s1195
          // Predicated region
          $region98: #{tpu_custom_call.1} parent=96 // pred_check
            _
          $region99: #{tpu_custom_call.1} parent=96 // pred_check_branch
            %1198 = sbr.rel (0) target = $region101
          $region100: #{tpu_custom_call.1} parent=96 // pred_region
            // Predicated region
            $region102: #{tpu_custom_call.1} parent=100 // pred_check
              _
            $region103: #{tpu_custom_call.1} parent=100 // pred_check_branch
              %1200 = sbr.rel target = $region105
            $region104: #{tpu_custom_call.1} parent=100 // pred_region
              // Predicated region
              $region117: #{tpu_custom_call.1} parent=104 // pred_check
                _
              $region118: #{tpu_custom_call.1} parent=104 // pred_check_branch
                %1230 = sbr.rel (0) target = $region120
              $region119: #{tpu_custom_call.1} parent=104 // pred_region
                loop: start=0, step=1, limit=1
                $region121: #{tpu_custom_call.1} parent=119 // loop_pre_header
                  _
                $region122: #{tpu_custom_call.1} parent=119 // loop_header
                  %s1232 = sphi 0, %s1236
                  %p1233 = scmp.ge.s32.totalorder %s1232, 1
                  %s1237 = sphi %s1111, %s1111
                  %s1238 = sphi %s1196, %s1196
                $region123: #{tpu_custom_call.1} parent=119 // loop_header_branch
                  %1235 = sbr.rel (%p1233) target = $region127
                $region124: #{tpu_custom_call.1} parent=119 // loop_body
                  _
                $region125: #{tpu_custom_call.1} parent=119 // loop_footer
                  %s1236 = sadd.s32 1, %s1232
                $region126: #{tpu_custom_call.1} parent=119 // loop_footer_branch
                  %1231 = sbr.rel target = $region122
                $region127: #{tpu_custom_call.1} parent=119 // loop_exit
                  _
                %s1240 = ssub.s32 16, 1
                loop: start=0, step=1, limit=1
                $region128: #{tpu_custom_call.1} parent=119 // loop_pre_header
                  _
                $region129: #{tpu_custom_call.1} parent=119 // loop_header
                  %s1242 = sphi 0, %s1246
                  %p1243 = scmp.ge.s32.totalorder %s1242, 1
                  %s1247 = sphi %s1111, %s1111
                  %s1248 = sphi %s1196, %s1196
                $region130: #{tpu_custom_call.1} parent=119 // loop_header_branch
                  %1245 = sbr.rel (%p1243) target = $region134
                $region131: #{tpu_custom_call.1} parent=119 // loop_body
                  %v1249 = vld [vmem:[%s1247] sm:%s1240]
                  %1250 = vst [vmem:[%s1248] sm:%s1240] %v1249
                  %v1251 = vld [vmem:[%s1247 + $0x4] sm:%s1240]
                  %1252 = vst [vmem:[%s1248 + $0x4] sm:%s1240] %v1251
                  %v1253 = vld [vmem:[%s1247 + $0x8] sm:%s1240]
                  %1254 = vst [vmem:[%s1248 + $0x10] sm:%s1240] %v1253
                  %v1255 = vld [vmem:[%s1247 + $0xc] sm:%s1240]
                  %1256 = vst [vmem:[%s1248 + $0x14] sm:%s1240] %v1255
                  %v1257 = vld [vmem:[%s1247 + $0x10] sm:%s1240]
                  %1258 = vst [vmem:[%s1248 + $0x20] sm:%s1240] %v1257
                  %v1259 = vld [vmem:[%s1247 + $0x14] sm:%s1240]
                  %1260 = vst [vmem:[%s1248 + $0x24] sm:%s1240] %v1259
                  %v1261 = vld [vmem:[%s1247 + $0x18] sm:%s1240]
                  %1262 = vst [vmem:[%s1248 + $0x30] sm:%s1240] %v1261
                  %v1263 = vld [vmem:[%s1247 + $0x1c] sm:%s1240]
                  %1264 = vst [vmem:[%s1248 + $0x34] sm:%s1240] %v1263
                $region132: #{tpu_custom_call.1} parent=119 // loop_footer
                  %s1246 = sadd.s32 1, %s1242
                $region133: #{tpu_custom_call.1} parent=119 // loop_footer_branch
                  %1241 = sbr.rel target = $region129
                $region134: #{tpu_custom_call.1} parent=119 // loop_exit
                  _
              $region120: #{tpu_custom_call.1} parent=104 // pred_fallthru
                _
            $region105: #{tpu_custom_call.1} parent=100 // pred_fallthru
              _
            // Predicated region
            $region106: #{tpu_custom_call.1} parent=100 // pred_check
              _
            $region107: #{tpu_custom_call.1} parent=100 // pred_check_branch
              %1202 = sbr.rel (0) target = $region109
            $region108: #{tpu_custom_call.1} parent=100 // pred_region
              %s1204 = ssub.s32 16, 1
              loop: start=0, step=1, limit=1
              $region110: #{tpu_custom_call.1} parent=108 // loop_pre_header
                _
              $region111: #{tpu_custom_call.1} parent=108 // loop_header
                %s1206 = sphi 0, %s1210
                %p1207 = scmp.ge.s32.totalorder %s1206, 1
                %s1211 = sphi %s1111, %s1111
                %s1212 = sphi %s1196, %s1196
              $region112: #{tpu_custom_call.1} parent=108 // loop_header_branch
                %1209 = sbr.rel (%p1207) target = $region116
              $region113: #{tpu_custom_call.1} parent=108 // loop_body
                %v1213 = vld [vmem:[%s1211] sm:%s1204]
                %1214 = vst [vmem:[%s1212] sm:%s1204] %v1213
                %v1215 = vld [vmem:[%s1211 + $0x4] sm:%s1204]
                %1216 = vst [vmem:[%s1212 + $0x4] sm:%s1204] %v1215
                %v1217 = vld [vmem:[%s1211 + $0x8] sm:%s1204]
                %1218 = vst [vmem:[%s1212 + $0x10] sm:%s1204] %v1217
                %v1219 = vld [vmem:[%s1211 + $0xc] sm:%s1204]
                %1220 = vst [vmem:[%s1212 + $0x14] sm:%s1204] %v1219
                %v1221 = vld [vmem:[%s1211 + $0x10] sm:%s1204]
                %1222 = vst [vmem:[%s1212 + $0x20] sm:%s1204] %v1221
                %v1223 = vld [vmem:[%s1211 + $0x14] sm:%s1204]
                %1224 = vst [vmem:[%s1212 + $0x24] sm:%s1204] %v1223
                %v1225 = vld [vmem:[%s1211 + $0x18] sm:%s1204]
                %1226 = vst [vmem:[%s1212 + $0x30] sm:%s1204] %v1225
                %v1227 = vld [vmem:[%s1211 + $0x1c] sm:%s1204]
                %1228 = vst [vmem:[%s1212 + $0x34] sm:%s1204] %v1227
              $region114: #{tpu_custom_call.1} parent=108 // loop_footer
                %s1210 = sadd.s32 1, %s1206
              $region115: #{tpu_custom_call.1} parent=108 // loop_footer_branch
                %1205 = sbr.rel target = $region111
              $region116: #{tpu_custom_call.1} parent=108 // loop_exit
                _
            $region109: #{tpu_custom_call.1} parent=100 // pred_fallthru
              _
          $region101: #{tpu_custom_call.1} parent=96 // pred_fallthru
            _
          %1265 = vnop
        $region97: #{tpu_custom_call.1} parent=51 // pred_fallthru
          _
      $region52: #{tpu_custom_call.1} parent=5 // pred_fallthru
        _
      %p1266 = scmp.le.s32.totalorder 2, %s16
      // Predicated region
      $region135: #{tpu_custom_call.1} parent=5 // pred_check
        %p1267 = pneg %p1266
      $region136: #{tpu_custom_call.1} parent=5 // pred_check_branch
        %1269 = sbr.rel (%p1267) target = $region138
      $region137: #{tpu_custom_call.1} parent=5 // pred_region
        %s1270 = ssub.s32 %s16, 2
        // Predicated region
        $region139: #{tpu_custom_call.1} parent=137 // pred_check
          %p1271 = pneg %p241
        $region140: #{tpu_custom_call.1} parent=137 // pred_check_branch
          %1273 = sbr.rel (%p1271) target = $region142
        $region141: #{tpu_custom_call.1} parent=137 // pred_region
          %s1274 = sand.u32 %s226, 1
          %s1275 = sand.u32 %s226, 1
          %s1276 = smul.addr %s1275, 32
          %s1277 = scalar_lea.vmem [#allocation2], %s1276
        $region142: #{tpu_custom_call.1} parent=137 // pred_fallthru
          _
        // Predicated region
        $region143: #{tpu_custom_call.1} parent=137 // pred_check
          %p1278 = pneg %p269
        $region144: #{tpu_custom_call.1} parent=137 // pred_check_branch
          %1280 = sbr.rel (%p1278) target = $region146
        $region145: #{tpu_custom_call.1} parent=137 // pred_region
          %s1281 = sand.u32 %s254, 1
          %s1282 = sand.u32 %s254, 1
          %s1283 = smul.addr %s1282, 32
          %s1284 = scalar_lea.vmem [#allocation3], %s1283
        $region146: #{tpu_custom_call.1} parent=137 // pred_fallthru
          _
      $region138: #{tpu_custom_call.1} parent=5 // pred_fallthru
        _
    $region6: #{tpu_custom_call.1} parent=1 // loop_footer
      %s20 = sadd.s32 1, %s16
    $region7: #{tpu_custom_call.1} parent=1 // loop_footer_branch
      %15 = sbr.rel target = $region3
    $region8: #{tpu_custom_call.1} parent=1 // loop_exit
      _

</llo_original>
